<compile_context>
chip_gen: v6e
topology: v6e:2x2x1
jax: 0.10.0
libtpu: 0.0.40
codegen_flags: <defaults>
</compile_context>

<pallas_src>
import functools

import numpy as np
import jax
import jax.numpy as jnp
from jax.experimental import pallas as pl
from jax.experimental.pallas import tpu as pltpu


# ----------------------------------------------------------------------------
# Fused kernel: all levels, whole batch, one grid step.
#   conv+BN+ReLU -> bilinear resize -> "concat" into VMEM scratch
#   -> single fusion conv (K = nlevels*C) + BN shift + ReLU -> lane-dense store
# ----------------------------------------------------------------------------
def _fuse_neck_kernel(*refs, nlevels):
    xs   = refs[0:nlevels]                 # (Cin_i, N*Hi*Wi)      bf16
    wts  = refs[nlevels:2 * nlevels]       # (C, Cin_i)            bf16  conv w^T * bn_scale
    shs  = refs[2 * nlevels:3 * nlevels]   # (C, 1)                f32   conv bn shift
    rms  = refs[3 * nlevels:4 * nlevels]   # (N*Hi*Wi, N*HWout)    bf16  block-diag resize
    wf_ref   = refs[4 * nlevels]           # (C, nlevels*C)        bf16  fusion w^T * fusion bn_scale
    bias_ref = refs[4 * nlevels + 1]       # (C, 1)                f32   fusion bn shift
    o_ref    = refs[4 * nlevels + 2]       # (C, N*HWout)          f32
    cat_ref  = refs[4 * nlevels + 3]       # (nlevels*C, N*HWout)  f32   scratch ("concat")

    c = o_ref.shape[0]
    for i in range(nlevels):
        # level 1x1 conv (BN scale folded into weight) + shift + ReLU, f32 accumulate
        y = jnp.dot(wts[i][...], xs[i][...], preferred_element_type=jnp.float32)
        y = jnp.maximum(y + shs[i][...], 0.0)
        # bilinear resize of all channels / all images at once (block-diag per image)
        z = jnp.dot(y.astype(jnp.bfloat16), rms[i][...],
                    preferred_element_type=jnp.float32)
        cat_ref[i * c:(i + 1) * c, :] = z
    # fused concat + fusion 1x1 conv (fusion BN scale folded in) + shift + ReLU
    out = jnp.dot(wf_ref[...], cat_ref[...].astype(jnp.bfloat16),
                  preferred_element_type=jnp.float32)
    o_ref[...] = jnp.maximum(out + bias_ref[...], 0.0).astype(o_ref.dtype)


# ----------------------------------------------------------------------------
# Bilinear interpolation matrix (PyTorch align_corners=False semantics)
# ----------------------------------------------------------------------------
def bilinear_matrix(out_size, in_size):
    d = np.arange(out_size, dtype=np.float64)
    scale = in_size / out_size
    src = (d + 0.5) * scale - 0.5
    src = np.maximum(src, 0.0)
    i0 = np.minimum(np.floor(src).astype(np.int64), in_size - 1)
    i1 = np.minimum(i0 + 1, in_size - 1)
    w1 = src - i0
    w0 = 1.0 - w1
    m = np.zeros((out_size, in_size), dtype=np.float32)
    rows = np.arange(out_size)
    m[rows, i0] += w0.astype(np.float32)
    m[rows, i1] += w1.astype(np.float32)
    return m


# ----------------------------------------------------------------------------
# Parameters (deterministic synthetic init; BN folded in eval mode)
# ----------------------------------------------------------------------------
def _make_conv_bn(key, cin, cout, eps=1e-5):
    k1, k2, k3, k4, k5 = jax.random.split(key, 5)
    w = jax.random.normal(k1, (cin, cout), jnp.float32) * (1.0 / np.sqrt(cin))
    gamma = jax.random.uniform(k2, (cout,), jnp.float32, 0.5, 1.5)
    beta = jax.random.normal(k3, (cout,), jnp.float32) * 0.1
    mean = jax.random.normal(k4, (cout,), jnp.float32) * 0.1
    var = jax.random.uniform(k5, (cout,), jnp.float32, 0.5, 1.5)
    scale = gamma / jnp.sqrt(var + eps)
    shift = beta - mean * scale
    return dict(w=w, scale=scale.reshape(1, cout), shift=shift.reshape(1, cout))


def fuse_neck_params(key, in_channels, channels):
    keys = jax.random.split(key, len(in_channels) + 1)
    return dict(
        convs=[_make_conv_bn(keys[i], cin, channels)
               for i, cin in enumerate(in_channels)],
        fusion=_make_conv_bn(keys[-1], channels * len(in_channels), channels),
    )


# ----------------------------------------------------------------------------
# One-time constant preparation (hoisted out of the forward path):
# fold BN, transpose weights, build bf16 block-diagonal resize matrices.
# ----------------------------------------------------------------------------
def fuse_neck_prepare(params, input_shapes, neck_scale=1):
    nlevels = len(input_shapes)
    N = input_shapes[0][0]
    Hout, Wout = input_shapes[neck_scale][2], input_shapes[neck_scale][3]
    C = params["convs"][0]["w"].shape[1]

    sf = params["fusion"]["scale"].reshape(-1)                    # (C,)
    wf = params["fusion"]["w"]                                    # (nlevels*C, C)

    wts, shifts, rblks = [], [], []
    for i, (_, _cin, h, w) in enumerate(input_shapes):
        p = params["convs"][i]
        # conv weight^T with BN scale folded in: (C, Cin_i), bf16 MXU operand
        wts.append((p["scale"].reshape(C, 1) * p["w"].T).astype(jnp.bfloat16))
        shifts.append(p["shift"].reshape(C, 1).astype(jnp.float32))
        # separable bilinear resize folded to one matrix, block-diag over batch
        r = np.kron(bilinear_matrix(Hout, h), bilinear_matrix(Wout, w)).T    # (h*w, HWout)
        rblk = np.kron(np.eye(N, dtype=np.float32), r)                       # (N*h*w, N*HWout)
        rblks.append(jnp.asarray(rblk, dtype=jnp.bfloat16))

    return dict(
        nlevels=nlevels, N=N, C=C, Hout=Hout, Wout=Wout,
        wts=wts, shifts=shifts, rblks=rblks,
        wf=(sf[:, None] * wf.T).astype(jnp.bfloat16),             # (C, nlevels*C)
        bias=params["fusion"]["shift"].reshape(C, 1).astype(jnp.float32),
    )


# ----------------------------------------------------------------------------
# Forward: one pallas_call, NCHW in -> NCHW out.
# ----------------------------------------------------------------------------
def fuse_neck_forward(prep, inputs_nchw):
    nlevels, N, C = prep["nlevels"], prep["N"], prep["C"]
    Hout, Wout = prep["Hout"], prep["Wout"]
    lanes = N * Hout * Wout

    # Pack batch into the lane axis: (N, Cin, H, W) -> (Cin, N*H*W), bf16.
    xs = [jnp.transpose(x, (1, 0, 2, 3))
             .reshape(x.shape[1], N * x.shape[2] * x.shape[3])
             .astype(jnp.bfloat16)
          for x in inputs_nchw]

    def full_spec(a):
        nd = a.ndim
        return pl.BlockSpec(a.shape, lambda i, _nd=nd: (0,) * _nd)

    operands = (*xs, *prep["wts"], *prep["shifts"], *prep["rblks"],
                prep["wf"], prep["bias"])
    kernel = functools.partial(_fuse_neck_kernel, nlevels=nlevels)

    out2d = pl.pallas_call(
        kernel,
        out_shape=jax.ShapeDtypeStruct((C, lanes), jnp.float32),
        grid=(1,),
        in_specs=[full_spec(a) for a in operands],
        out_specs=pl.BlockSpec((C, lanes), lambda i: (0, 0)),
        scratch_shapes=[pltpu.VMEM((nlevels * C, lanes), jnp.float32)],
        compiler_params=pltpu.CompilerParams(
            dimension_semantics=("arbitrary",)),
    )(*operands)

    # (C, N*Hout*Wout) -> NCHW.
    return jnp.transpose(out2d.reshape(C, N, Hout, Wout), (1, 0, 2, 3))


# ----------------------------------------------------------------------------
# Pure-JAX f32 reference implementing the ORIGINAL op order
# (conv+BN+ReLU -> resize -> concat -> fusion conv+BN+ReLU), for correctness.
# ----------------------------------------------------------------------------
def fuse_neck_ref(params, inputs_nchw, neck_scale=1):
    Hout, Wout = inputs_nchw[neck_scale].shape[2:]
    outs = []
    for idx, x in enumerate(inputs_nchw):
        _, _cin, H, W = x.shape
        p = params["convs"][idx]
        xh = jnp.transpose(x, (0, 2, 3, 1))
        y = jnp.maximum(jnp.einsum("nhwc,cd->nhwd", xh, p["w"]) * p["scale"]
                        + p["shift"], 0.0)
        ry = jnp.asarray(bilinear_matrix(Hout, H))
        rx = jnp.asarray(bilinear_matrix(Wout, W))
        z = jnp.einsum("oh,nhwd->nowd", ry, y)
        z = jnp.einsum("pw,nowd->nopd", rx, z)
        outs.append(z)
    cat = jnp.concatenate(outs, axis=-1)
    pf = params["fusion"]
    out = jnp.maximum(jnp.einsum("nhwc,cd->nhwd", cat, pf["w"]) * pf["scale"]
                      + pf["shift"], 0.0)
    return jnp.transpose(out, (0, 3, 1, 2))


if __name__ == "__main__":
    key = jax.random.PRNGKey(0)
    # Small shapes consistent with the module (4 pyramid levels, neck_scale=1).
    in_channels = [8, 16, 32, 64]
    channels = 32
    spatial = [(16, 16), (8, 8), (4, 4), (2, 2)]
    N = 2

    pkey, *ikeys = jax.random.split(key, 1 + len(in_channels))
    inputs = [
        jax.random.normal(ikeys[i],
                          (N, in_channels[i], spatial[i][0], spatial[i][1]),
                          jnp.float32)
        for i in range(len(in_channels))
    ]
    params = fuse_neck_params(pkey, in_channels, channels)

    # Constants built once, reused every call.
    prep = fuse_neck_prepare(params, [x.shape for x in inputs], neck_scale=1)

    out = fuse_neck_forward(prep, inputs)
    out = jax.block_until_ready(out)

    ref = fuse_neck_ref(params, inputs, neck_scale=1)
    assert out.shape == (N, channels, spatial[1][0], spatial[1][1]), out.shape
    # bf16 MXU operands (f32 accumulation) -> tolerance loosened vs. pure-f32.
    err = float(jnp.max(jnp.abs(out - ref)))
    assert err < 1e-1, f"max abs error {err}"
    print("KERNEL_OK")
</pallas_src>

<mosaic_0001>
module attributes {stable_mosaic.version = 11 : i64} {
  func.func @_fuse_neck_kernel(%arg0: i32, %arg1: memref<8x512xbf16, #tpu.memory_space<vmem>>, %arg2: memref<16x128xbf16, #tpu.memory_space<vmem>>, %arg3: memref<32x32xbf16, #tpu.memory_space<vmem>>, %arg4: memref<64x8xbf16, #tpu.memory_space<vmem>>, %arg5: memref<32x8xbf16, #tpu.memory_space<vmem>>, %arg6: memref<32x16xbf16, #tpu.memory_space<vmem>>, %arg7: memref<32x32xbf16, #tpu.memory_space<vmem>>, %arg8: memref<32x64xbf16, #tpu.memory_space<vmem>>, %arg9: memref<32x1xf32, #tpu.memory_space<vmem>>, %arg10: memref<32x1xf32, #tpu.memory_space<vmem>>, %arg11: memref<32x1xf32, #tpu.memory_space<vmem>>, %arg12: memref<32x1xf32, #tpu.memory_space<vmem>>, %arg13: memref<512x128xbf16, #tpu.memory_space<vmem>>, %arg14: memref<128x128xbf16, #tpu.memory_space<vmem>>, %arg15: memref<32x128xbf16, #tpu.memory_space<vmem>>, %arg16: memref<8x128xbf16, #tpu.memory_space<vmem>>, %arg17: memref<32x128xbf16, #tpu.memory_space<vmem>>, %arg18: memref<32x1xf32, #tpu.memory_space<vmem>>, %arg19: memref<32x128xf32, #tpu.memory_space<vmem>>, %arg20: memref<128x128xf32, #tpu.memory_space<vmem>>) attributes {dimension_semantics = [#tpu.dimension_semantics<arbitrary>], iteration_bounds = array<i64: 1>, scalar_prefetch = 0 : i64, scratch_operands = 1 : i64, tpu.core_type = #tpu.core_type<tc>, window_params = [{pipeline_mode = #tpu.pipeline_mode<synchronous>, transform_indices = @transform_0, window_bounds = array<i64: 8, 512>}, {pipeline_mode = #tpu.pipeline_mode<synchronous>, transform_indices = @transform_1, window_bounds = array<i64: 16, 128>}, {pipeline_mode = #tpu.pipeline_mode<synchronous>, transform_indices = @transform_2, window_bounds = array<i64: 32, 32>}, {pipeline_mode = #tpu.pipeline_mode<synchronous>, transform_indices = @transform_3, window_bounds = array<i64: 64, 8>}, {pipeline_mode = #tpu.pipeline_mode<synchronous>, transform_indices = @transform_4, window_bounds = array<i64: 32, 8>}, {pipeline_mode = #tpu.pipeline_mode<synchronous>, transform_indices = @transform_5, window_bounds = array<i64: 32, 16>}, {pipeline_mode = #tpu.pipeline_mode<synchronous>, transform_indices = @transform_6, window_bounds = array<i64: 32, 32>}, {pipeline_mode = #tpu.pipeline_mode<synchronous>, transform_indices = @transform_7, window_bounds = array<i64: 32, 64>}, {pipeline_mode = #tpu.pipeline_mode<synchronous>, transform_indices = @transform_8, window_bounds = array<i64: 32, 1>}, {pipeline_mode = #tpu.pipeline_mode<synchronous>, transform_indices = @transform_9, window_bounds = array<i64: 32, 1>}, {pipeline_mode = #tpu.pipeline_mode<synchronous>, transform_indices = @transform_10, window_bounds = array<i64: 32, 1>}, {pipeline_mode = #tpu.pipeline_mode<synchronous>, transform_indices = @transform_11, window_bounds = array<i64: 32, 1>}, {pipeline_mode = #tpu.pipeline_mode<synchronous>, transform_indices = @transform_12, window_bounds = array<i64: 512, 128>}, {pipeline_mode = #tpu.pipeline_mode<synchronous>, transform_indices = @transform_13, window_bounds = array<i64: 128, 128>}, {pipeline_mode = #tpu.pipeline_mode<synchronous>, transform_indices = @transform_14, window_bounds = array<i64: 32, 128>}, {pipeline_mode = #tpu.pipeline_mode<synchronous>, transform_indices = @transform_15, window_bounds = array<i64: 8, 128>}, {pipeline_mode = #tpu.pipeline_mode<synchronous>, transform_indices = @transform_16, window_bounds = array<i64: 32, 128>}, {pipeline_mode = #tpu.pipeline_mode<synchronous>, transform_indices = @transform_17, window_bounds = array<i64: 32, 1>}, {pipeline_mode = #tpu.pipeline_mode<synchronous>, transform_indices = @transform_18, window_bounds = array<i64: 32, 128>}]} {
    %c0 = arith.constant 0 : index
    %c0_0 = arith.constant 0 : index
    %0 = vector.load %arg5[%c0, %c0_0] : memref<32x8xbf16, #tpu.memory_space<vmem>>, vector<32x8xbf16>
    %c0_1 = arith.constant 0 : index
    %c0_2 = arith.constant 0 : index
    %1 = vector.load %arg1[%c0_1, %c0_2] : memref<8x512xbf16, #tpu.memory_space<vmem>>, vector<8x512xbf16>
    %cst = arith.constant dense<0.000000e+00> : vector<32x512xf32>
    %2 = tpu.matmul %0, %1, %cst {dimension_numbers = #tpu.dot_dimension_numbers<[1], [0], [0], [1], [0, 0, 1, 1], [], []>} : vector<32x8xbf16>, vector<8x512xbf16>, vector<32x512xf32> -> vector<32x512xf32>
    %c0_3 = arith.constant 0 : index
    %c0_4 = arith.constant 0 : index
    %3 = vector.load %arg9[%c0_3, %c0_4] : memref<32x1xf32, #tpu.memory_space<vmem>>, vector<32x1xf32>
    %4 = vector.broadcast %3 : vector<32x1xf32> to vector<32x512xf32>
    %5 = arith.addf %2, %4 : vector<32x512xf32>
    %cst_5 = arith.constant 0.000000e+00 : f32
    %6 = vector.broadcast %cst_5 : f32 to vector<32x512xf32>
    %7 = arith.maximumf %5, %6 : vector<32x512xf32>
    %8 = arith.truncf %7 : vector<32x512xf32> to vector<32x512xbf16>
    %c0_6 = arith.constant 0 : index
    %c0_7 = arith.constant 0 : index
    %9 = vector.load %arg13[%c0_6, %c0_7] : memref<512x128xbf16, #tpu.memory_space<vmem>>, vector<512x128xbf16>
    %cst_8 = arith.constant dense<0.000000e+00> : vector<32x128xf32>
    %10 = tpu.matmul %8, %9, %cst_8 {dimension_numbers = #tpu.dot_dimension_numbers<[1], [0], [0], [1], [0, 0, 1, 1], [], []>} : vector<32x512xbf16>, vector<512x128xbf16>, vector<32x128xf32> -> vector<32x128xf32>
    %c0_9 = arith.constant 0 : index
    %c0_10 = arith.constant 0 : index
    %11 = vector.load %arg20[%c0_9, %c0_10] : memref<128x128xf32, #tpu.memory_space<vmem>>, vector<32x128xf32>
    tpu.vector_store %arg20[%c0_9, %c0_10], %10 {strides = array<i32>} : memref<128x128xf32, #tpu.memory_space<vmem>>, vector<32x128xf32>,
    %c0_11 = arith.constant 0 : index
    %c0_12 = arith.constant 0 : index
    %12 = vector.load %arg6[%c0_11, %c0_12] : memref<32x16xbf16, #tpu.memory_space<vmem>>, vector<32x16xbf16>
    %c0_13 = arith.constant 0 : index
    %c0_14 = arith.constant 0 : index
    %13 = vector.load %arg2[%c0_13, %c0_14] : memref<16x128xbf16, #tpu.memory_space<vmem>>, vector<16x128xbf16>
    %cst_15 = arith.constant dense<0.000000e+00> : vector<32x128xf32>
    %14 = tpu.matmul %12, %13, %cst_15 {dimension_numbers = #tpu.dot_dimension_numbers<[1], [0], [0], [1], [0, 0, 1, 1], [], []>} : vector<32x16xbf16>, vector<16x128xbf16>, vector<32x128xf32> -> vector<32x128xf32>
    %c0_16 = arith.constant 0 : index
    %c0_17 = arith.constant 0 : index
    %15 = vector.load %arg10[%c0_16, %c0_17] : memref<32x1xf32, #tpu.memory_space<vmem>>, vector<32x1xf32>
    %16 = vector.broadcast %15 : vector<32x1xf32> to vector<32x128xf32>
    %17 = arith.addf %14, %16 : vector<32x128xf32>
    %cst_18 = arith.constant 0.000000e+00 : f32
    %18 = vector.broadcast %cst_18 : f32 to vector<32x128xf32>
    %19 = arith.maximumf %17, %18 : vector<32x128xf32>
    %20 = arith.truncf %19 : vector<32x128xf32> to vector<32x128xbf16>
    %c0_19 = arith.constant 0 : index
    %c0_20 = arith.constant 0 : index
    %21 = vector.load %arg14[%c0_19, %c0_20] : memref<128x128xbf16, #tpu.memory_space<vmem>>, vector<128x128xbf16>
    %cst_21 = arith.constant dense<0.000000e+00> : vector<32x128xf32>
    %22 = tpu.matmul %20, %21, %cst_21 {dimension_numbers = #tpu.dot_dimension_numbers<[1], [0], [0], [1], [0, 0, 1, 1], [], []>} : vector<32x128xbf16>, vector<128x128xbf16>, vector<32x128xf32> -> vector<32x128xf32>
    %c32 = arith.constant 32 : index
    %c0_22 = arith.constant 0 : index
    %23 = vector.load %arg20[%c32, %c0_22] : memref<128x128xf32, #tpu.memory_space<vmem>>, vector<32x128xf32>
    tpu.vector_store %arg20[%c32, %c0_22], %22 {strides = array<i32>} : memref<128x128xf32, #tpu.memory_space<vmem>>, vector<32x128xf32>,
    %c0_23 = arith.constant 0 : index
    %c0_24 = arith.constant 0 : index
    %24 = vector.load %arg7[%c0_23, %c0_24] : memref<32x32xbf16, #tpu.memory_space<vmem>>, vector<32x32xbf16>
    %c0_25 = arith.constant 0 : index
    %c0_26 = arith.constant 0 : index
    %25 = vector.load %arg3[%c0_25, %c0_26] : memref<32x32xbf16, #tpu.memory_space<vmem>>, vector<32x32xbf16>
    %cst_27 = arith.constant dense<0.000000e+00> : vector<32x32xf32>
    %26 = tpu.matmul %24, %25, %cst_27 {dimension_numbers = #tpu.dot_dimension_numbers<[1], [0], [0], [1], [0, 0, 1, 1], [], []>} : vector<32x32xbf16>, vector<32x32xbf16>, vector<32x32xf32> -> vector<32x32xf32>
    %c0_28 = arith.constant 0 : index
    %c0_29 = arith.constant 0 : index
    %27 = vector.load %arg11[%c0_28, %c0_29] : memref<32x1xf32, #tpu.memory_space<vmem>>, vector<32x1xf32>
    %28 = vector.broadcast %27 : vector<32x1xf32> to vector<32x32xf32>
    %29 = arith.addf %26, %28 : vector<32x32xf32>
    %cst_30 = arith.constant 0.000000e+00 : f32
    %30 = vector.broadcast %cst_30 : f32 to vector<32x32xf32>
    %31 = arith.maximumf %29, %30 : vector<32x32xf32>
    %32 = arith.truncf %31 : vector<32x32xf32> to vector<32x32xbf16>
    %c0_31 = arith.constant 0 : index
    %c0_32 = arith.constant 0 : index
    %33 = vector.load %arg15[%c0_31, %c0_32] : memref<32x128xbf16, #tpu.memory_space<vmem>>, vector<32x128xbf16>
    %cst_33 = arith.constant dense<0.000000e+00> : vector<32x128xf32>
    %34 = tpu.matmul %32, %33, %cst_33 {dimension_numbers = #tpu.dot_dimension_numbers<[1], [0], [0], [1], [0, 0, 1, 1], [], []>} : vector<32x32xbf16>, vector<32x128xbf16>, vector<32x128xf32> -> vector<32x128xf32>
    %c64 = arith.constant 64 : index
    %c0_34 = arith.constant 0 : index
    %35 = vector.load %arg20[%c64, %c0_34] : memref<128x128xf32, #tpu.memory_space<vmem>>, vector<32x128xf32>
    tpu.vector_store %arg20[%c64, %c0_34], %34 {strides = array<i32>} : memref<128x128xf32, #tpu.memory_space<vmem>>, vector<32x128xf32>,
    %c0_35 = arith.constant 0 : index
    %c0_36 = arith.constant 0 : index
    %36 = vector.load %arg8[%c0_35, %c0_36] : memref<32x64xbf16, #tpu.memory_space<vmem>>, vector<32x64xbf16>
    %c0_37 = arith.constant 0 : index
    %c0_38 = arith.constant 0 : index
    %37 = vector.load %arg4[%c0_37, %c0_38] : memref<64x8xbf16, #tpu.memory_space<vmem>>, vector<64x8xbf16>
    %cst_39 = arith.constant dense<0.000000e+00> : vector<32x8xf32>
    %38 = tpu.matmul %36, %37, %cst_39 {dimension_numbers = #tpu.dot_dimension_numbers<[1], [0], [0], [1], [0, 0, 1, 1], [], []>} : vector<32x64xbf16>, vector<64x8xbf16>, vector<32x8xf32> -> vector<32x8xf32>
    %c0_40 = arith.constant 0 : index
    %c0_41 = arith.constant 0 : index
    %39 = vector.load %arg12[%c0_40, %c0_41] : memref<32x1xf32, #tpu.memory_space<vmem>>, vector<32x1xf32>
    %40 = vector.broadcast %39 : vector<32x1xf32> to vector<32x8xf32>
    %41 = arith.addf %38, %40 : vector<32x8xf32>
    %cst_42 = arith.constant 0.000000e+00 : f32
    %42 = vector.broadcast %cst_42 : f32 to vector<32x8xf32>
    %43 = arith.maximumf %41, %42 : vector<32x8xf32>
    %44 = arith.truncf %43 : vector<32x8xf32> to vector<32x8xbf16>
    %c0_43 = arith.constant 0 : index
    %c0_44 = arith.constant 0 : index
    %45 = vector.load %arg16[%c0_43, %c0_44] : memref<8x128xbf16, #tpu.memory_space<vmem>>, vector<8x128xbf16>
    %cst_45 = arith.constant dense<0.000000e+00> : vector<32x128xf32>
    %46 = tpu.matmul %44, %45, %cst_45 {dimension_numbers = #tpu.dot_dimension_numbers<[1], [0], [0], [1], [0, 0, 1, 1], [], []>} : vector<32x8xbf16>, vector<8x128xbf16>, vector<32x128xf32> -> vector<32x128xf32>
    %c96 = arith.constant 96 : index
    %c0_46 = arith.constant 0 : index
    %47 = vector.load %arg20[%c96, %c0_46] : memref<128x128xf32, #tpu.memory_space<vmem>>, vector<32x128xf32>
    tpu.vector_store %arg20[%c96, %c0_46], %46 {strides = array<i32>} : memref<128x128xf32, #tpu.memory_space<vmem>>, vector<32x128xf32>,
    %c0_47 = arith.constant 0 : index
    %c0_48 = arith.constant 0 : index
    %48 = vector.load %arg17[%c0_47, %c0_48] : memref<32x128xbf16, #tpu.memory_space<vmem>>, vector<32x128xbf16>
    %c0_49 = arith.constant 0 : index
    %c0_50 = arith.constant 0 : index
    %49 = vector.load %arg20[%c0_49, %c0_50] : memref<128x128xf32, #tpu.memory_space<vmem>>, vector<128x128xf32>
    %50 = arith.truncf %49 : vector<128x128xf32> to vector<128x128xbf16>
    %cst_51 = arith.constant dense<0.000000e+00> : vector<32x128xf32>
    %51 = tpu.matmul %48, %50, %cst_51 {dimension_numbers = #tpu.dot_dimension_numbers<[1], [0], [0], [1], [0, 0, 1, 1], [], []>} : vector<32x128xbf16>, vector<128x128xbf16>, vector<32x128xf32> -> vector<32x128xf32>
    %c0_52 = arith.constant 0 : index
    %c0_53 = arith.constant 0 : index
    %52 = vector.load %arg18[%c0_52, %c0_53] : memref<32x1xf32, #tpu.memory_space<vmem>>, vector<32x1xf32>
    %53 = vector.broadcast %52 : vector<32x1xf32> to vector<32x128xf32>
    %54 = arith.addf %51, %53 : vector<32x128xf32>
    %cst_54 = arith.constant 0.000000e+00 : f32
    %55 = vector.broadcast %cst_54 : f32 to vector<32x128xf32>
    %56 = arith.maximumf %54, %55 : vector<32x128xf32>
    %c0_55 = arith.constant 0 : index
    %c0_56 = arith.constant 0 : index
    %57 = vector.load %arg19[%c0_55, %c0_56] : memref<32x128xf32, #tpu.memory_space<vmem>>, vector<32x128xf32>
    tpu.vector_store %arg19[%c0_55, %c0_56], %56 {strides = array<i32>} : memref<32x128xf32, #tpu.memory_space<vmem>>, vector<32x128xf32>,
    return
  }
  func.func @transform_0(%arg0: i32) -> (i32, i32) {
    %c0_i32 = arith.constant 0 : i32
    %c0_i32_0 = arith.constant 0 : i32
    %c0_i32_1 = arith.constant 0 : i32
    return %c0_i32, %c0_i32_0 : i32, i32
  }
  func.func @transform_1(%arg0: i32) -> (i32, i32) {
    %c0_i32 = arith.constant 0 : i32
    %c0_i32_0 = arith.constant 0 : i32
    %c0_i32_1 = arith.constant 0 : i32
    return %c0_i32, %c0_i32_0 : i32, i32
  }
  func.func @transform_2(%arg0: i32) -> (i32, i32) {
    %c0_i32 = arith.constant 0 : i32
    %c0_i32_0 = arith.constant 0 : i32
    %c0_i32_1 = arith.constant 0 : i32
    return %c0_i32, %c0_i32_0 : i32, i32
  }
  func.func @transform_3(%arg0: i32) -> (i32, i32) {
    %c0_i32 = arith.constant 0 : i32
    %c0_i32_0 = arith.constant 0 : i32
    %c0_i32_1 = arith.constant 0 : i32
    return %c0_i32, %c0_i32_0 : i32, i32
  }
  func.func @transform_4(%arg0: i32) -> (i32, i32) {
    %c0_i32 = arith.constant 0 : i32
    %c0_i32_0 = arith.constant 0 : i32
    %c0_i32_1 = arith.constant 0 : i32
    return %c0_i32, %c0_i32_0 : i32, i32
  }
  func.func @transform_5(%arg0: i32) -> (i32, i32) {
    %c0_i32 = arith.constant 0 : i32
    %c0_i32_0 = arith.constant 0 : i32
    %c0_i32_1 = arith.constant 0 : i32
    return %c0_i32, %c0_i32_0 : i32, i32
  }
  func.func @transform_6(%arg0: i32) -> (i32, i32) {
    %c0_i32 = arith.constant 0 : i32
    %c0_i32_0 = arith.constant 0 : i32
    %c0_i32_1 = arith.constant 0 : i32
    return %c0_i32, %c0_i32_0 : i32, i32
  }
  func.func @transform_7(%arg0: i32) -> (i32, i32) {
    %c0_i32 = arith.constant 0 : i32
    %c0_i32_0 = arith.constant 0 : i32
    %c0_i32_1 = arith.constant 0 : i32
    return %c0_i32, %c0_i32_0 : i32, i32
  }
  func.func @transform_8(%arg0: i32) -> (i32, i32) {
    %c0_i32 = arith.constant 0 : i32
    %c0_i32_0 = arith.constant 0 : i32
    %c0_i32_1 = arith.constant 0 : i32
    return %c0_i32, %c0_i32_0 : i32, i32
  }
  func.func @transform_9(%arg0: i32) -> (i32, i32) {
    %c0_i32 = arith.constant 0 : i32
    %c0_i32_0 = arith.constant 0 : i32
    %c0_i32_1 = arith.constant 0 : i32
    return %c0_i32, %c0_i32_0 : i32, i32
  }
  func.func @transform_10(%arg0: i32) -> (i32, i32) {
    %c0_i32 = arith.constant 0 : i32
    %c0_i32_0 = arith.constant 0 : i32
    %c0_i32_1 = arith.constant 0 : i32
    return %c0_i32, %c0_i32_0 : i32, i32
  }
  func.func @transform_11(%arg0: i32) -> (i32, i32) {
    %c0_i32 = arith.constant 0 : i32
    %c0_i32_0 = arith.constant 0 : i32
    %c0_i32_1 = arith.constant 0 : i32
    return %c0_i32, %c0_i32_0 : i32, i32
  }
  func.func @transform_12(%arg0: i32) -> (i32, i32) {
    %c0_i32 = arith.constant 0 : i32
    %c0_i32_0 = arith.constant 0 : i32
    %c0_i32_1 = arith.constant 0 : i32
    return %c0_i32, %c0_i32_0 : i32, i32
  }
  func.func @transform_13(%arg0: i32) -> (i32, i32) {
    %c0_i32 = arith.constant 0 : i32
    %c0_i32_0 = arith.constant 0 : i32
    %c0_i32_1 = arith.constant 0 : i32
    return %c0_i32, %c0_i32_0 : i32, i32
  }
  func.func @transform_14(%arg0: i32) -> (i32, i32) {
    %c0_i32 = arith.constant 0 : i32
    %c0_i32_0 = arith.constant 0 : i32
    %c0_i32_1 = arith.constant 0 : i32
    return %c0_i32, %c0_i32_0 : i32, i32
  }
  func.func @transform_15(%arg0: i32) -> (i32, i32) {
    %c0_i32 = arith.constant 0 : i32
    %c0_i32_0 = arith.constant 0 : i32
    %c0_i32_1 = arith.constant 0 : i32
    return %c0_i32, %c0_i32_0 : i32, i32
  }
  func.func @transform_16(%arg0: i32) -> (i32, i32) {
    %c0_i32 = arith.constant 0 : i32
    %c0_i32_0 = arith.constant 0 : i32
    %c0_i32_1 = arith.constant 0 : i32
    return %c0_i32, %c0_i32_0 : i32, i32
  }
  func.func @transform_17(%arg0: i32) -> (i32, i32) {
    %c0_i32 = arith.constant 0 : i32
    %c0_i32_0 = arith.constant 0 : i32
    %c0_i32_1 = arith.constant 0 : i32
    return %c0_i32, %c0_i32_0 : i32, i32
  }
  func.func @transform_18(%arg0: i32) -> (i32, i32) {
    %c0_i32 = arith.constant 0 : i32
    %c0_i32_0 = arith.constant 0 : i32
    %c0_i32_1 = arith.constant 0 : i32
    return %c0_i32, %c0_i32_0 : i32, i32
  }
}

</mosaic_0001>

<llo_original>
// kernel: tpu_custom_call.1
$region0: #{tpu_custom_call.1}
  #allocation0 [shape = 'u32[]', space=smem, size = 0x4, offset = 0x4, fixed_abs, tag = 'smem constant byte address 0x4 - core index']
  #allocation1 [shape = 'u32[144,128]{1,0:T(1,128)}', space=vmem, size = 0x12000, scoped, tag = 'internal scratch']
  #allocation2 [shape = 'f32[128,128]{1,0:T(8,128)}', space=vmem, size = 0x10000, scoped, tag = 'scratch operand']
  %s0 = inlined_call_operand.hbm [shape: bf16[8,512], index: 0, kind: input, shape index: {}]
  %s1 = inlined_call_operand.hbm [shape: bf16[16,128], index: 1, kind: input, shape index: {}]
  %s2 = inlined_call_operand.hbm [shape: bf16[32,32], index: 2, kind: input, shape index: {}]
  %s3 = inlined_call_operand.vmem [shape: bf16[64,8], index: 3, kind: input, shape index: {}]
  %s4 = inlined_call_operand.vmem [shape: bf16[32,8], index: 4, kind: input, shape index: {}]
  %s5 = inlined_call_operand.vmem [shape: bf16[32,16], index: 5, kind: input, shape index: {}]
  %s6 = inlined_call_operand.hbm [shape: bf16[32,32], index: 6, kind: input, shape index: {}]
  %s7 = inlined_call_operand.hbm [shape: bf16[32,64], index: 7, kind: input, shape index: {}]
  %s8 = inlined_call_operand.vmem [shape: f32[32,1], index: 8, kind: input, shape index: {}]
  %s9 = inlined_call_operand.vmem [shape: f32[32,1], index: 9, kind: input, shape index: {}]
  %s10 = inlined_call_operand.vmem [shape: f32[32,1], index: 10, kind: input, shape index: {}]
  %s11 = inlined_call_operand.vmem [shape: f32[32,1], index: 11, kind: input, shape index: {}]
  %s12 = inlined_call_operand.vmem [shape: bf16[512,128], index: 12, kind: input, shape index: {}]
  %s13 = inlined_call_operand.hbm [shape: bf16[128,128], index: 13, kind: input, shape index: {}]
  %s14 = inlined_call_operand.hbm [shape: bf16[32,128], index: 14, kind: input, shape index: {}]
  %s15 = inlined_call_operand.hbm [shape: bf16[8,128], index: 15, kind: input, shape index: {}]
  %s16 = inlined_call_operand.vmem [shape: bf16[32,128], index: 16, kind: input, shape index: {}]
  %s17 = inlined_call_operand.vmem [shape: f32[32,1], index: 17, kind: input, shape index: {}]
  %s18 = inlined_call_operand.hbm [shape: f32[32,128], index: 18, kind: output, shape index: {}]
  %s19 = sld [smem:[#allocation0]]
  $region114: #{tpu_custom_call.1} parent=0
    _
  %s21 = ssub.s32 1, %s19
  %s22 = scalar_select 0, %s21, %s19
  $region1: #{tpu_custom_call.1} parent=0
    #allocation3 [shape = 'u8[8192]{0}', space=vmem, size = 0x2000, scoped, tag = 'input window, operand 0, single buffered']
    #allocation4 [shape = 's32[1]{0}', space=sflag, size = 0x4, scoped, tag = 'scoped memory for tpu_custom_call.1']
    #allocation5 [shape = 's32[1]{0}', space=sflag, size = 0x4, scoped, tag = 'scoped memory for tpu_custom_call.1']
    #allocation6 [shape = 'u8[4096]{0}', space=vmem, size = 0x1000, scoped, tag = 'input window, operand 1, single buffered']
    #allocation7 [shape = 's32[1]{0}', space=sflag, size = 0x4, scoped, tag = 'scoped memory for tpu_custom_call.1']
    #allocation8 [shape = 'u8[8192]{0}', space=vmem, size = 0x2000, scoped, tag = 'input window, operand 2, single buffered']
    #allocation9 [shape = 'u8[8192]{0}', space=vmem, size = 0x2000, scoped, tag = 'input window, operand 6, single buffered']
    #allocation10 [shape = 's32[1]{0}', space=sflag, size = 0x4, scoped, tag = 'scoped memory for tpu_custom_call.1']
    #allocation11 [shape = 'u8[8192]{0}', space=vmem, size = 0x2000, scoped, tag = 'input window, operand 7, single buffered']
    #allocation12 [shape = 'u8[32768]{0}', space=vmem, size = 0x8000, scoped, tag = 'input window, operand 13, single buffered']
    #allocation13 [shape = 's32[1]{0}', space=sflag, size = 0x4, scoped, tag = 'scoped memory for tpu_custom_call.1']
    #allocation14 [shape = 'u8[8192]{0}', space=vmem, size = 0x2000, scoped, tag = 'input window, operand 14, single buffered']
    #allocation15 [shape = 'u8[2048]{0}', space=vmem, size = 0x800, scoped, tag = 'input window, operand 15, single buffered']
    #allocation16 [shape = 's32[1]{0}', space=sflag, size = 0x4, scoped, tag = 'scoped memory for tpu_custom_call.1']
    #allocation17 [shape = 'u8[16384]{0}', space=vmem, size = 0x4000, scoped, tag = 'output window, operand 0, single buffered']
    %23 = vsyncpa [#allocation4], 0
    %24 = vsyncpa [#allocation7], 0
    %25 = vsyncpa [#allocation10], 0
    %26 = vsyncpa [#allocation13], 0
    %27 = vsyncpa [#allocation16], 0
    %28 = vsyncpa [#allocation5], 0
    // Predicated region
    $region2: #{tpu_custom_call.1} parent=1 // pred_check
      _
    $region3: #{tpu_custom_call.1} parent=1 // pred_check_branch
      %30 = sbr.rel (0) target = $region5
    $region4: #{tpu_custom_call.1} parent=1 // pred_region
      %s32 = ssub.s32 256, 256
      %33 = vsyncadd [#allocation4], %s32
      %s35 = sshll.u32 [#allocation3], 4
      %s36 = int_to_ptr.vmem [resolvable:$true] %s35
      %38 = dma.hbm_to_vmem [thread:$0]  %s0, 256, %s36, [#allocation4]
    $region5: #{tpu_custom_call.1} parent=1 // pred_fallthru
      _
    // Predicated region
    $region6: #{tpu_custom_call.1} parent=1 // pred_check
      _
    $region7: #{tpu_custom_call.1} parent=1 // pred_check_branch
      %40 = sbr.rel (0) target = $region9
    $region8: #{tpu_custom_call.1} parent=1 // pred_region
      %s42 = ssub.s32 128, 128
      %43 = vsyncadd [#allocation7], %s42
      %s44 = sshll.u32 [#allocation6], 4
      %s45 = int_to_ptr.vmem [resolvable:$true] %s44
      %50 = dma.hbm_to_vmem [thread:$0]  %s1, 128, %s45, [#allocation7], 64, 64, 4
    $region9: #{tpu_custom_call.1} parent=1 // pred_fallthru
      _
    // Predicated region
    $region10: #{tpu_custom_call.1} parent=1 // pred_check
      _
    $region11: #{tpu_custom_call.1} parent=1 // pred_check_branch
      %52 = sbr.rel (0) target = $region13
    $region12: #{tpu_custom_call.1} parent=1 // pred_region
      %s54 = ssub.s32 256, 256
      %55 = vsyncadd [#allocation7], %s54
      %s56 = sshll.u32 [#allocation8], 4
      %s57 = int_to_ptr.vmem [resolvable:$true] %s56
      %62 = dma.hbm_to_vmem [thread:$0]  %s2, 256, %s57, [#allocation7], 64, 64, 4
    $region13: #{tpu_custom_call.1} parent=1 // pred_fallthru
      _
    // Predicated region
    $region14: #{tpu_custom_call.1} parent=1 // pred_check
      _
    $region15: #{tpu_custom_call.1} parent=1 // pred_check_branch
      %64 = sbr.rel (0) target = $region17
    $region16: #{tpu_custom_call.1} parent=1 // pred_region
      _
    $region17: #{tpu_custom_call.1} parent=1 // pred_fallthru
      _
    // Predicated region
    $region18: #{tpu_custom_call.1} parent=1 // pred_check
      _
    $region19: #{tpu_custom_call.1} parent=1 // pred_check_branch
      %66 = sbr.rel (0) target = $region21
    $region20: #{tpu_custom_call.1} parent=1 // pred_region
      _
    $region21: #{tpu_custom_call.1} parent=1 // pred_fallthru
      _
    // Predicated region
    $region22: #{tpu_custom_call.1} parent=1 // pred_check
      _
    $region23: #{tpu_custom_call.1} parent=1 // pred_check_branch
      %68 = sbr.rel (0) target = $region25
    $region24: #{tpu_custom_call.1} parent=1 // pred_region
      _
    $region25: #{tpu_custom_call.1} parent=1 // pred_fallthru
      _
    // Predicated region
    $region26: #{tpu_custom_call.1} parent=1 // pred_check
      _
    $region27: #{tpu_custom_call.1} parent=1 // pred_check_branch
      %70 = sbr.rel (0) target = $region29
    $region28: #{tpu_custom_call.1} parent=1 // pred_region
      %s72 = ssub.s32 256, 256
      %73 = vsyncadd [#allocation10], %s72
      %s74 = sshll.u32 [#allocation9], 4
      %s75 = int_to_ptr.vmem [resolvable:$true] %s74
      %80 = dma.hbm_to_vmem [thread:$0]  %s6, 256, %s75, [#allocation10], 64, 64, 4
    $region29: #{tpu_custom_call.1} parent=1 // pred_fallthru
      _
    // Predicated region
    $region30: #{tpu_custom_call.1} parent=1 // pred_check
      _
    $region31: #{tpu_custom_call.1} parent=1 // pred_check_branch
      %82 = sbr.rel (0) target = $region33
    $region32: #{tpu_custom_call.1} parent=1 // pred_region
      %s84 = ssub.s32 256, 256
      %85 = vsyncadd [#allocation10], %s84
      %s86 = sshll.u32 [#allocation11], 4
      %s87 = int_to_ptr.vmem [resolvable:$true] %s86
      %92 = dma.hbm_to_vmem [thread:$0]  %s7, 256, %s87, [#allocation10], 64, 64, 4
    $region33: #{tpu_custom_call.1} parent=1 // pred_fallthru
      _
    // Predicated region
    $region34: #{tpu_custom_call.1} parent=1 // pred_check
      _
    $region35: #{tpu_custom_call.1} parent=1 // pred_check_branch
      %94 = sbr.rel (0) target = $region37
    $region36: #{tpu_custom_call.1} parent=1 // pred_region
      _
    $region37: #{tpu_custom_call.1} parent=1 // pred_fallthru
      _
    // Predicated region
    $region38: #{tpu_custom_call.1} parent=1 // pred_check
      _
    $region39: #{tpu_custom_call.1} parent=1 // pred_check_branch
      %96 = sbr.rel (0) target = $region41
    $region40: #{tpu_custom_call.1} parent=1 // pred_region
      _
    $region41: #{tpu_custom_call.1} parent=1 // pred_fallthru
      _
    // Predicated region
    $region42: #{tpu_custom_call.1} parent=1 // pred_check
      _
    $region43: #{tpu_custom_call.1} parent=1 // pred_check_branch
      %98 = sbr.rel (0) target = $region45
    $region44: #{tpu_custom_call.1} parent=1 // pred_region
      _
    $region45: #{tpu_custom_call.1} parent=1 // pred_fallthru
      _
    // Predicated region
    $region46: #{tpu_custom_call.1} parent=1 // pred_check
      _
    $region47: #{tpu_custom_call.1} parent=1 // pred_check_branch
      %100 = sbr.rel (0) target = $region49
    $region48: #{tpu_custom_call.1} parent=1 // pred_region
      _
    $region49: #{tpu_custom_call.1} parent=1 // pred_fallthru
      _
    // Predicated region
    $region50: #{tpu_custom_call.1} parent=1 // pred_check
      _
    $region51: #{tpu_custom_call.1} parent=1 // pred_check_branch
      %102 = sbr.rel (0) target = $region53
    $region52: #{tpu_custom_call.1} parent=1 // pred_region
      _
    $region53: #{tpu_custom_call.1} parent=1 // pred_fallthru
      _
    // Predicated region
    $region54: #{tpu_custom_call.1} parent=1 // pred_check
      _
    $region55: #{tpu_custom_call.1} parent=1 // pred_check_branch
      %104 = sbr.rel (0) target = $region57
    $region56: #{tpu_custom_call.1} parent=1 // pred_region
      %s106 = ssub.s32 1024, 1024
      %107 = vsyncadd [#allocation13], %s106
      %s108 = sshll.u32 [#allocation12], 4
      %s109 = int_to_ptr.vmem [resolvable:$true] %s108
      %114 = dma.hbm_to_vmem [thread:$0]  %s13, 1024, %s109, [#allocation13], 64, 64, 4
    $region57: #{tpu_custom_call.1} parent=1 // pred_fallthru
      _
    // Predicated region
    $region58: #{tpu_custom_call.1} parent=1 // pred_check
      _
    $region59: #{tpu_custom_call.1} parent=1 // pred_check_branch
      %116 = sbr.rel (0) target = $region61
    $region60: #{tpu_custom_call.1} parent=1 // pred_region
      %s118 = ssub.s32 256, 256
      %119 = vsyncadd [#allocation13], %s118
      %s120 = sshll.u32 [#allocation14], 4
      %s121 = int_to_ptr.vmem [resolvable:$true] %s120
      %126 = dma.hbm_to_vmem [thread:$0]  %s14, 256, %s121, [#allocation13], 64, 64, 4
    $region61: #{tpu_custom_call.1} parent=1 // pred_fallthru
      _
    // Predicated region
    $region62: #{tpu_custom_call.1} parent=1 // pred_check
      _
    $region63: #{tpu_custom_call.1} parent=1 // pred_check_branch
      %128 = sbr.rel (0) target = $region65
    $region64: #{tpu_custom_call.1} parent=1 // pred_region
      %s130 = ssub.s32 64, 64
      %131 = vsyncadd [#allocation16], %s130
      %s133 = sshll.u32 [#allocation15], 4
      %s134 = int_to_ptr.vmem [resolvable:$true] %s133
      %136 = dma.hbm_to_vmem [thread:$0]  %s15, 64, %s134, [#allocation16]
    $region65: #{tpu_custom_call.1} parent=1 // pred_fallthru
      _
    // Predicated region
    $region66: #{tpu_custom_call.1} parent=1 // pred_check
      _
    $region67: #{tpu_custom_call.1} parent=1 // pred_check_branch
      %138 = sbr.rel (0) target = $region69
    $region68: #{tpu_custom_call.1} parent=1 // pred_region
      _
    $region69: #{tpu_custom_call.1} parent=1 // pred_fallthru
      _
    // Predicated region
    $region70: #{tpu_custom_call.1} parent=1 // pred_check
      _
    $region71: #{tpu_custom_call.1} parent=1 // pred_check_branch
      %140 = sbr.rel (0) target = $region73
    $region72: #{tpu_custom_call.1} parent=1 // pred_region
      _
    $region73: #{tpu_custom_call.1} parent=1 // pred_fallthru
      _
    // Predicated region
    $region74: #{tpu_custom_call.1} parent=1 // pred_check
      _
    $region75: #{tpu_custom_call.1} parent=1 // pred_check_branch
      %142 = sbr.rel (0) target = $region77
    $region76: #{tpu_custom_call.1} parent=1 // pred_region
      %143 = dma.done [#allocation4], 256
    $region77: #{tpu_custom_call.1} parent=1 // pred_fallthru
      _
    // Predicated region
    $region78: #{tpu_custom_call.1} parent=1 // pred_check
      _
    $region79: #{tpu_custom_call.1} parent=1 // pred_check_branch
      %145 = sbr.rel (0) target = $region81
    $region80: #{tpu_custom_call.1} parent=1 // pred_region
      %146 = dma.done [#allocation7], 128
    $region81: #{tpu_custom_call.1} parent=1 // pred_fallthru
      _
    // Predicated region
    $region82: #{tpu_custom_call.1} parent=1 // pred_check
      _
    $region83: #{tpu_custom_call.1} parent=1 // pred_check_branch
      %148 = sbr.rel (0) target = $region85
    $region84: #{tpu_custom_call.1} parent=1 // pred_region
      %149 = dma.done [#allocation7], 256
    $region85: #{tpu_custom_call.1} parent=1 // pred_fallthru
      _
    // Predicated region
    $region86: #{tpu_custom_call.1} parent=1 // pred_check
      _
    $region87: #{tpu_custom_call.1} parent=1 // pred_check_branch
      %151 = sbr.rel (0) target = $region89
    $region88: #{tpu_custom_call.1} parent=1 // pred_region
      %152 = dma.done [#allocation10], 256
    $region89: #{tpu_custom_call.1} parent=1 // pred_fallthru
      _
    // Predicated region
    $region90: #{tpu_custom_call.1} parent=1 // pred_check
      _
    $region91: #{tpu_custom_call.1} parent=1 // pred_check_branch
      %154 = sbr.rel (0) target = $region93
    $region92: #{tpu_custom_call.1} parent=1 // pred_region
      %155 = dma.done [#allocation10], 256
    $region93: #{tpu_custom_call.1} parent=1 // pred_fallthru
      _
    // Predicated region
    $region94: #{tpu_custom_call.1} parent=1 // pred_check
      _
    $region95: #{tpu_custom_call.1} parent=1 // pred_check_branch
      %157 = sbr.rel (0) target = $region97
    $region96: #{tpu_custom_call.1} parent=1 // pred_region
      %158 = dma.done [#allocation13], 1024
    $region97: #{tpu_custom_call.1} parent=1 // pred_fallthru
      _
    // Predicated region
    $region98: #{tpu_custom_call.1} parent=1 // pred_check
      _
    $region99: #{tpu_custom_call.1} parent=1 // pred_check_branch
      %160 = sbr.rel (0) target = $region101
    $region100: #{tpu_custom_call.1} parent=1 // pred_region
      %161 = dma.done [#allocation13], 256
    $region101: #{tpu_custom_call.1} parent=1 // pred_fallthru
      _
    // Predicated region
    $region102: #{tpu_custom_call.1} parent=1 // pred_check
      _
    $region103: #{tpu_custom_call.1} parent=1 // pred_check_branch
      %163 = sbr.rel (0) target = $region105
    $region104: #{tpu_custom_call.1} parent=1 // pred_region
      %164 = dma.done [#allocation16], 64
    $region105: #{tpu_custom_call.1} parent=1 // pred_fallthru
      _
    %v166 = vld [vmem:[%s4] sm:$0xf]
    %v167 = vld [vmem:[%s4 + $0x4] sm:$0xf]
    %v168 = vld [vmem:[%s4 + $0x8] sm:$0xf]
    %v169 = vld [vmem:[%s4 + $0xc] sm:$0xf]
    %v170 = vld [vmem:[#allocation3] sm:$0xff]
    %v171 = vld [vmem:[#allocation3 + $0x8] sm:$0xff]
    %v172 = vld [vmem:[%s8] sm:$0xff]
    %v173 = vld [vmem:[%s8 + $0x8] sm:$0xff]
    %v174 = vld [vmem:[%s8 + $0x10] sm:$0xff]
    %v175 = vld [vmem:[%s8 + $0x18] sm:$0xff]
    %177 = vset.pattern.permute.xlu0 0
    %178 = vperm.xlu0 %177, %v172
    %v179 = vpop.permute.xlu0 %178
    %182 = vset.pattern.permute.xlu0 0
    %183 = vperm.xlu0 %182, %v173
    %v184 = vpop.permute.xlu0 %183
    %187 = vset.pattern.permute.xlu0 0
    %188 = vperm.xlu0 %187, %v174
    %v189 = vpop.permute.xlu0 %188
    %192 = vset.pattern.permute.xlu0 0
    %193 = vperm.xlu0 %192, %v175
    %v194 = vpop.permute.xlu0 %193
    %v200 = vunpack.c.l.b16 %v166
    %v201 = vunpack.c.l.b16 %v167
    %v202 = vunpack.c.l.b16 %v168
    %v203 = vunpack.c.l.b16 %v169
    %v204 = vpack.c.b16 %v201, %v200
    %v205 = vpack.c.b16 %v203, %v202
    %v208 = vunpack.c.l.b16 %v170
    %v209 = vunpack.c.h.b16 %v170
    %v210 = vunpack.c.l.b16 %v171
    %v211 = vunpack.c.h.b16 %v171
    %v212 = vpack.c.b16 %v208, %v208
    %v213 = vpack.c.b16 %v209, %v209
    %v214 = vpack.c.b16 %v210, %v210
    %v215 = vpack.c.b16 %v211, %v211
    %vm216 = vcmask 64512
    %v218 = vsel %vm216, %v204, 0
    %v221 = vsel %vm216, %v205, 0
    %vm223 = vcmask 1043456
    %v225 = vsel %vm223, %v212, 0
    %v228 = vsel %vm223, %v213, 0
    %v231 = vsel %vm223, %v214, 0
    %v234 = vsel %vm223, %v215, 0
    %236 = vmatprep.subr.bf16.mxu0 0
    %237 = vmatpush1.bf16.msra.mxu0 0
    %238 = vmatprep.subr.bf16.mxu0 0
    %239 = vmatpush1.bf16.msra.mxu0 0
    %240 = vmatprep.subr.bf16.mxu0 0
    %241 = vmatpush1.bf16.msra.mxu0 0
    %242 = vmatprep.subr.bf16.mxu0 0
    %243 = vmatpush1.bf16.msra.mxu0 0
    %244 = vmatprep.subr.bf16.mxu0 0
    %245 = vmatpush1.bf16.msra.mxu0 0
    %246 = vmatprep.subr.bf16.mxu0 0
    %247 = vmatpush1.bf16.msra.mxu0 0
    %248 = vmatprep.subr.bf16.mxu0 0
    %249 = vmatpush1.bf16.msra.mxu0 0
    %250 = vmatprep.subr.bf16.mxu0 %v228
    %251 = vmatpush1.bf16.msra.mxu0 %v225
    %252 = vmatprep.subr.bf16.mxu0 0
    %253 = vmatpush2.bf16.msra.mxu0 0
    %254 = vmatprep.subr.bf16.mxu0 0
    %255 = vmatpush2.bf16.msra.mxu0 0
    %256 = vmatprep.subr.bf16.mxu0 0
    %257 = vmatpush2.bf16.msra.mxu0 0
    %258 = vmatprep.subr.bf16.mxu0 0
    %259 = vmatpush2.bf16.msra.mxu0 0
    %260 = vmatprep.subr.bf16.mxu0 0
    %261 = vmatpush2.bf16.msra.mxu0 0
    %262 = vmatprep.subr.bf16.mxu0 0
    %263 = vmatpush2.bf16.msra.mxu0 0
    %264 = vmatprep.subr.bf16.mxu0 0
    %265 = vmatpush2.bf16.msra.mxu0 0
    %266 = vmatprep.subr.bf16.mxu0 0
    %267 = vmatpush2.bf16.msra.mxu0 0
    %268 = vmatprep.mubr.bf16.mxu0 0
    %269 = vmatmul.mubr.bf16.gmra.mxu0 %v218
    %v270 = vpop.f32.mrf.mxu0
    %v271 = vadd.f32 %v179, %v270
    %v272 = vpop.f32.mrf.mxu0
    %v273 = vadd.f32 %v179, %v272
    %v274 = vpop.f32.mrf.mxu0
    %v275 = vadd.f32 %v184, %v274
    %v276 = vpop.f32.mrf.mxu0
    %v277 = vadd.f32 %v184, %v276
    %278 = vmatprep.mubr.bf16.mxu0 0
    %279 = vmatmul.mubr.bf16.gmra.mxu0 %v221
    %v280 = vpop.f32.mrf.mxu0
    %v281 = vadd.f32 %v189, %v280
    %v282 = vpop.f32.mrf.mxu0
    %v283 = vadd.f32 %v189, %v282
    %v284 = vpop.f32.mrf.mxu0
    %v285 = vadd.f32 %v194, %v284
    %v286 = vpop.f32.mrf.mxu0
    %v287 = vadd.f32 %v194, %v286
    %288 = vdwg.mxu0
    %289 = vmatprep.subr.bf16.mxu0 0
    %290 = vmatpush1.bf16.msra.mxu0 0
    %291 = vmatprep.subr.bf16.mxu0 0
    %292 = vmatpush1.bf16.msra.mxu0 0
    %293 = vmatprep.subr.bf16.mxu0 0
    %294 = vmatpush1.bf16.msra.mxu0 0
    %295 = vmatprep.subr.bf16.mxu0 0
    %296 = vmatpush1.bf16.msra.mxu0 0
    %297 = vmatprep.subr.bf16.mxu0 0
    %298 = vmatpush1.bf16.msra.mxu0 0
    %299 = vmatprep.subr.bf16.mxu0 0
    %300 = vmatpush1.bf16.msra.mxu0 0
    %301 = vmatprep.subr.bf16.mxu0 0
    %302 = vmatpush1.bf16.msra.mxu0 0
    %303 = vmatprep.subr.bf16.mxu0 %v234
    %304 = vmatpush1.bf16.msra.mxu0 %v231
    %305 = vmatprep.subr.bf16.mxu0 0
    %306 = vmatpush2.bf16.msra.mxu0 0
    %307 = vmatprep.subr.bf16.mxu0 0
    %308 = vmatpush2.bf16.msra.mxu0 0
    %309 = vmatprep.subr.bf16.mxu0 0
    %310 = vmatpush2.bf16.msra.mxu0 0
    %311 = vmatprep.subr.bf16.mxu0 0
    %312 = vmatpush2.bf16.msra.mxu0 0
    %313 = vmatprep.subr.bf16.mxu0 0
    %314 = vmatpush2.bf16.msra.mxu0 0
    %315 = vmatprep.subr.bf16.mxu0 0
    %316 = vmatpush2.bf16.msra.mxu0 0
    %317 = vmatprep.subr.bf16.mxu0 0
    %318 = vmatpush2.bf16.msra.mxu0 0
    %319 = vmatprep.subr.bf16.mxu0 0
    %320 = vmatpush2.bf16.msra.mxu0 0
    %321 = vmatprep.mubr.bf16.mxu0 0
    %322 = vmatmul.mubr.bf16.gmra.mxu0 %v218
    %v323 = vpop.f32.mrf.mxu0
    %v324 = vadd.f32 %v179, %v323
    %v325 = vpop.f32.mrf.mxu0
    %v326 = vadd.f32 %v179, %v325
    %v327 = vpop.f32.mrf.mxu0
    %v328 = vadd.f32 %v184, %v327
    %v329 = vpop.f32.mrf.mxu0
    %v330 = vadd.f32 %v184, %v329
    %331 = vmatprep.mubr.bf16.mxu0 0
    %332 = vmatmul.mubr.bf16.gmra.mxu0 %v221
    %v333 = vpop.f32.mrf.mxu0
    %v334 = vadd.f32 %v189, %v333
    %v335 = vpop.f32.mrf.mxu0
    %v336 = vadd.f32 %v189, %v335
    %v337 = vpop.f32.mrf.mxu0
    %v338 = vadd.f32 %v194, %v337
    %v339 = vpop.f32.mrf.mxu0
    %v340 = vadd.f32 %v194, %v339
    %341 = vdwg.mxu0
    %v342 = vmax.f32 %v271, 0.0
    %v343 = vmax.f32 %v273, 0.0
    %v344 = vmax.f32 %v324, 0.0
    %v345 = vmax.f32 %v326, 0.0
    %v346 = vmax.f32 %v275, 0.0
    %v347 = vmax.f32 %v277, 0.0
    %v348 = vmax.f32 %v328, 0.0
    %v349 = vmax.f32 %v330, 0.0
    %v350 = vmax.f32 %v281, 0.0
    %v351 = vmax.f32 %v283, 0.0
    %v352 = vmax.f32 %v334, 0.0
    %v353 = vmax.f32 %v336, 0.0
    %v354 = vmax.f32 %v285, 0.0
    %v355 = vmax.f32 %v287, 0.0
    %v356 = vmax.f32 %v338, 0.0
    %v357 = vmax.f32 %v340, 0.0
    %v358 = vpack.c.bf16 %v346, %v342
    %v359 = vpack.c.bf16 %v347, %v343
    %v360 = vpack.c.bf16 %v348, %v344
    %v361 = vpack.c.bf16 %v349, %v345
    %v362 = vpack.c.bf16 %v354, %v350
    %v363 = vpack.c.bf16 %v355, %v351
    %v364 = vpack.c.bf16 %v356, %v352
    %v365 = vpack.c.bf16 %v357, %v353
    %v366 = vld [vmem:[%s12] sm:$0xf]
    %v367 = vld [vmem:[%s12 + $0x4] sm:$0xf]
    %v368 = vld [vmem:[%s12 + $0x8] sm:$0xf]
    %v369 = vld [vmem:[%s12 + $0xc] sm:$0xf]
    %v370 = vld [vmem:[%s12 + $0x10] sm:$0xf]
    %v371 = vld [vmem:[%s12 + $0x14] sm:$0xf]
    %v372 = vld [vmem:[%s12 + $0x18] sm:$0xf]
    %v373 = vld [vmem:[%s12 + $0x1c] sm:$0xf]
    %v374 = vld [vmem:[%s12 + $0x20] sm:$0xf]
    %v375 = vld [vmem:[%s12 + $0x24] sm:$0xf]
    %v376 = vld [vmem:[%s12 + $0x28] sm:$0xf]
    %v377 = vld [vmem:[%s12 + $0x2c] sm:$0xf]
    %v378 = vld [vmem:[%s12 + $0x30] sm:$0xf]
    %v379 = vld [vmem:[%s12 + $0x34] sm:$0xf]
    %v380 = vld [vmem:[%s12 + $0x38] sm:$0xf]
    %v381 = vld [vmem:[%s12 + $0x3c] sm:$0xf]
    %v382 = vld [vmem:[%s12 + $0x40] sm:$0xf]
    %v383 = vld [vmem:[%s12 + $0x44] sm:$0xf]
    %v384 = vld [vmem:[%s12 + $0x48] sm:$0xf]
    %v385 = vld [vmem:[%s12 + $0x4c] sm:$0xf]
    %v386 = vld [vmem:[%s12 + $0x50] sm:$0xf]
    %v387 = vld [vmem:[%s12 + $0x54] sm:$0xf]
    %v388 = vld [vmem:[%s12 + $0x58] sm:$0xf]
    %v389 = vld [vmem:[%s12 + $0x5c] sm:$0xf]
    %v390 = vld [vmem:[%s12 + $0x60] sm:$0xf]
    %v391 = vld [vmem:[%s12 + $0x64] sm:$0xf]
    %v392 = vld [vmem:[%s12 + $0x68] sm:$0xf]
    %v393 = vld [vmem:[%s12 + $0x6c] sm:$0xf]
    %v394 = vld [vmem:[%s12 + $0x70] sm:$0xf]
    %v395 = vld [vmem:[%s12 + $0x74] sm:$0xf]
    %v396 = vld [vmem:[%s12 + $0x78] sm:$0xf]
    %v397 = vld [vmem:[%s12 + $0x7c] sm:$0xf]
    %v398 = vld [vmem:[%s12 + $0x80] sm:$0xf]
    %v399 = vld [vmem:[%s12 + $0x84] sm:$0xf]
    %v400 = vld [vmem:[%s12 + $0x88] sm:$0xf]
    %v401 = vld [vmem:[%s12 + $0x8c] sm:$0xf]
    %v402 = vld [vmem:[%s12 + $0x90] sm:$0xf]
    %v403 = vld [vmem:[%s12 + $0x94] sm:$0xf]
    %v404 = vld [vmem:[%s12 + $0x98] sm:$0xf]
    %v405 = vld [vmem:[%s12 + $0x9c] sm:$0xf]
    %v406 = vld [vmem:[%s12 + $0xa0] sm:$0xf]
    %v407 = vld [vmem:[%s12 + $0xa4] sm:$0xf]
    %v408 = vld [vmem:[%s12 + $0xa8] sm:$0xf]
    %v409 = vld [vmem:[%s12 + $0xac] sm:$0xf]
    %v410 = vld [vmem:[%s12 + $0xb0] sm:$0xf]
    %v411 = vld [vmem:[%s12 + $0xb4] sm:$0xf]
    %v412 = vld [vmem:[%s12 + $0xb8] sm:$0xf]
    %v413 = vld [vmem:[%s12 + $0xbc] sm:$0xf]
    %v414 = vld [vmem:[%s12 + $0xc0] sm:$0xf]
    %v415 = vld [vmem:[%s12 + $0xc4] sm:$0xf]
    %v416 = vld [vmem:[%s12 + $0xc8] sm:$0xf]
    %v417 = vld [vmem:[%s12 + $0xcc] sm:$0xf]
    %v418 = vld [vmem:[%s12 + $0xd0] sm:$0xf]
    %v419 = vld [vmem:[%s12 + $0xd4] sm:$0xf]
    %v420 = vld [vmem:[%s12 + $0xd8] sm:$0xf]
    %v421 = vld [vmem:[%s12 + $0xdc] sm:$0xf]
    %v422 = vld [vmem:[%s12 + $0xe0] sm:$0xf]
    %v423 = vld [vmem:[%s12 + $0xe4] sm:$0xf]
    %v424 = vld [vmem:[%s12 + $0xe8] sm:$0xf]
    %v425 = vld [vmem:[%s12 + $0xec] sm:$0xf]
    %v426 = vld [vmem:[%s12 + $0xf0] sm:$0xf]
    %v427 = vld [vmem:[%s12 + $0xf4] sm:$0xf]
    %v428 = vld [vmem:[%s12 + $0xf8] sm:$0xf]
    %v429 = vld [vmem:[%s12 + $0xfc] sm:$0xf]
    %v494 = vunpack.c.l.b16 %v366
    %v495 = vunpack.c.l.b16 %v367
    %v496 = vunpack.c.l.b16 %v368
    %v497 = vunpack.c.l.b16 %v369
    %v498 = vunpack.c.l.b16 %v370
    %v499 = vunpack.c.l.b16 %v371
    %v500 = vunpack.c.l.b16 %v372
    %v501 = vunpack.c.l.b16 %v373
    %v502 = vunpack.c.l.b16 %v374
    %v503 = vunpack.c.l.b16 %v375
    %v504 = vunpack.c.l.b16 %v376
    %v505 = vunpack.c.l.b16 %v377
    %v506 = vunpack.c.l.b16 %v378
    %v507 = vunpack.c.l.b16 %v379
    %v508 = vunpack.c.l.b16 %v380
    %v509 = vunpack.c.l.b16 %v381
    %v510 = vunpack.c.l.b16 %v382
    %v511 = vunpack.c.l.b16 %v383
    %v512 = vunpack.c.l.b16 %v384
    %v513 = vunpack.c.l.b16 %v385
    %v514 = vunpack.c.l.b16 %v386
    %v515 = vunpack.c.l.b16 %v387
    %v516 = vunpack.c.l.b16 %v388
    %v517 = vunpack.c.l.b16 %v389
    %v518 = vunpack.c.l.b16 %v390
    %v519 = vunpack.c.l.b16 %v391
    %v520 = vunpack.c.l.b16 %v392
    %v521 = vunpack.c.l.b16 %v393
    %v522 = vunpack.c.l.b16 %v394
    %v523 = vunpack.c.l.b16 %v395
    %v524 = vunpack.c.l.b16 %v396
    %v525 = vunpack.c.l.b16 %v397
    %v526 = vunpack.c.l.b16 %v398
    %v527 = vunpack.c.l.b16 %v399
    %v528 = vunpack.c.l.b16 %v400
    %v529 = vunpack.c.l.b16 %v401
    %v530 = vunpack.c.l.b16 %v402
    %v531 = vunpack.c.l.b16 %v403
    %v532 = vunpack.c.l.b16 %v404
    %v533 = vunpack.c.l.b16 %v405
    %v534 = vunpack.c.l.b16 %v406
    %v535 = vunpack.c.l.b16 %v407
    %v536 = vunpack.c.l.b16 %v408
    %v537 = vunpack.c.l.b16 %v409
    %v538 = vunpack.c.l.b16 %v410
    %v539 = vunpack.c.l.b16 %v411
    %v540 = vunpack.c.l.b16 %v412
    %v541 = vunpack.c.l.b16 %v413
    %v542 = vunpack.c.l.b16 %v414
    %v543 = vunpack.c.l.b16 %v415
    %v544 = vunpack.c.l.b16 %v416
    %v545 = vunpack.c.l.b16 %v417
    %v546 = vunpack.c.l.b16 %v418
    %v547 = vunpack.c.l.b16 %v419
    %v548 = vunpack.c.l.b16 %v420
    %v549 = vunpack.c.l.b16 %v421
    %v550 = vunpack.c.l.b16 %v422
    %v551 = vunpack.c.l.b16 %v423
    %v552 = vunpack.c.l.b16 %v424
    %v553 = vunpack.c.l.b16 %v425
    %v554 = vunpack.c.l.b16 %v426
    %v555 = vunpack.c.l.b16 %v427
    %v556 = vunpack.c.l.b16 %v428
    %v557 = vunpack.c.l.b16 %v429
    %v558 = vpack.c.b16 %v495, %v494
    %v559 = vpack.c.b16 %v497, %v496
    %v560 = vpack.c.b16 %v499, %v498
    %v561 = vpack.c.b16 %v501, %v500
    %v562 = vpack.c.b16 %v503, %v502
    %v563 = vpack.c.b16 %v505, %v504
    %v564 = vpack.c.b16 %v507, %v506
    %v565 = vpack.c.b16 %v509, %v508
    %v566 = vpack.c.b16 %v511, %v510
    %v567 = vpack.c.b16 %v513, %v512
    %v568 = vpack.c.b16 %v515, %v514
    %v569 = vpack.c.b16 %v517, %v516
    %v570 = vpack.c.b16 %v519, %v518
    %v571 = vpack.c.b16 %v521, %v520
    %v572 = vpack.c.b16 %v523, %v522
    %v573 = vpack.c.b16 %v525, %v524
    %v574 = vpack.c.b16 %v527, %v526
    %v575 = vpack.c.b16 %v529, %v528
    %v576 = vpack.c.b16 %v531, %v530
    %v577 = vpack.c.b16 %v533, %v532
    %v578 = vpack.c.b16 %v535, %v534
    %v579 = vpack.c.b16 %v537, %v536
    %v580 = vpack.c.b16 %v539, %v538
    %v581 = vpack.c.b16 %v541, %v540
    %v582 = vpack.c.b16 %v543, %v542
    %v583 = vpack.c.b16 %v545, %v544
    %v584 = vpack.c.b16 %v547, %v546
    %v585 = vpack.c.b16 %v549, %v548
    %v586 = vpack.c.b16 %v551, %v550
    %v587 = vpack.c.b16 %v553, %v552
    %v588 = vpack.c.b16 %v555, %v554
    %v589 = vpack.c.b16 %v557, %v556
    %622 = vmatprep.subr.bf16.mxu0 0
    %623 = vmatpush1.bf16.msra.mxu0 %v565
    %624 = vmatprep.subr.bf16.mxu0 0
    %625 = vmatpush1.bf16.msra.mxu0 %v564
    %626 = vmatprep.subr.bf16.mxu0 0
    %627 = vmatpush1.bf16.msra.mxu0 %v563
    %628 = vmatprep.subr.bf16.mxu0 0
    %629 = vmatpush1.bf16.msra.mxu0 %v562
    %630 = vmatprep.subr.bf16.mxu0 0
    %631 = vmatpush1.bf16.msra.mxu0 %v561
    %632 = vmatprep.subr.bf16.mxu0 0
    %633 = vmatpush1.bf16.msra.mxu0 %v560
    %634 = vmatprep.subr.bf16.mxu0 0
    %635 = vmatpush1.bf16.msra.mxu0 %v559
    %636 = vmatprep.subr.bf16.mxu0 0
    %637 = vmatpush1.bf16.msra.mxu0 %v558
    %638 = vmatprep.subr.bf16.mxu0 0
    %639 = vmatpush2.bf16.msra.mxu0 %v573
    %640 = vmatprep.subr.bf16.mxu0 0
    %641 = vmatpush2.bf16.msra.mxu0 %v572
    %642 = vmatprep.subr.bf16.mxu0 0
    %643 = vmatpush2.bf16.msra.mxu0 %v571
    %644 = vmatprep.subr.bf16.mxu0 0
    %645 = vmatpush2.bf16.msra.mxu0 %v570
    %646 = vmatprep.subr.bf16.mxu0 0
    %647 = vmatpush2.bf16.msra.mxu0 %v569
    %648 = vmatprep.subr.bf16.mxu0 0
    %649 = vmatpush2.bf16.msra.mxu0 %v568
    %650 = vmatprep.subr.bf16.mxu0 0
    %651 = vmatpush2.bf16.msra.mxu0 %v567
    %652 = vmatprep.subr.bf16.mxu0 0
    %653 = vmatpush2.bf16.msra.mxu0 %v566
    %654 = vmatprep.mubr.bf16.mxu0 %v359
    %655 = vmatmul.mubr.bf16.gmra.mxu0 %v358
    %v656 = vpop.f32.mrf.mxu0
    %v657 = vadd.f32 0.0, %v656
    %v658 = vpop.f32.mrf.mxu0
    %v659 = vpop.f32.mrf.mxu0
    %v660 = vadd.f32 0.0, %v659
    %v661 = vpop.f32.mrf.mxu0
    %662 = vmatprep.mubr.bf16.mxu0 %v363
    %663 = vmatmul.mubr.bf16.gmra.mxu0 %v362
    %v664 = vpop.f32.mrf.mxu0
    %v665 = vadd.f32 0.0, %v664
    %v666 = vpop.f32.mrf.mxu0
    %v667 = vpop.f32.mrf.mxu0
    %v668 = vadd.f32 0.0, %v667
    %v669 = vpop.f32.mrf.mxu0
    %670 = vdwg.mxu0
    %671 = vmatprep.subr.bf16.mxu0 0
    %672 = vmatpush1.bf16.msra.mxu0 %v581
    %673 = vmatprep.subr.bf16.mxu0 0
    %674 = vmatpush1.bf16.msra.mxu0 %v580
    %675 = vmatprep.subr.bf16.mxu0 0
    %676 = vmatpush1.bf16.msra.mxu0 %v579
    %677 = vmatprep.subr.bf16.mxu0 0
    %678 = vmatpush1.bf16.msra.mxu0 %v578
    %679 = vmatprep.subr.bf16.mxu0 0
    %680 = vmatpush1.bf16.msra.mxu0 %v577
    %681 = vmatprep.subr.bf16.mxu0 0
    %682 = vmatpush1.bf16.msra.mxu0 %v576
    %683 = vmatprep.subr.bf16.mxu0 0
    %684 = vmatpush1.bf16.msra.mxu0 %v575
    %685 = vmatprep.subr.bf16.mxu0 0
    %686 = vmatpush1.bf16.msra.mxu0 %v574
    %687 = vmatprep.subr.bf16.mxu0 0
    %688 = vmatpush2.bf16.msra.mxu0 %v589
    %689 = vmatprep.subr.bf16.mxu0 0
    %690 = vmatpush2.bf16.msra.mxu0 %v588
    %691 = vmatprep.subr.bf16.mxu0 0
    %692 = vmatpush2.bf16.msra.mxu0 %v587
    %693 = vmatprep.subr.bf16.mxu0 0
    %694 = vmatpush2.bf16.msra.mxu0 %v586
    %695 = vmatprep.subr.bf16.mxu0 0
    %696 = vmatpush2.bf16.msra.mxu0 %v585
    %697 = vmatprep.subr.bf16.mxu0 0
    %698 = vmatpush2.bf16.msra.mxu0 %v584
    %699 = vmatprep.subr.bf16.mxu0 0
    %700 = vmatpush2.bf16.msra.mxu0 %v583
    %701 = vmatprep.subr.bf16.mxu0 0
    %702 = vmatpush2.bf16.msra.mxu0 %v582
    %703 = vmatprep.mubr.bf16.mxu0 %v361
    %704 = vmatmul.mubr.bf16.gmra.mxu0 %v360
    %v705 = vpop.f32.mrf.mxu0
    %v706 = vadd.f32 %v657, %v705
    %v707 = vpop.f32.mrf.mxu0
    %v708 = vpop.f32.mrf.mxu0
    %v709 = vadd.f32 %v660, %v708
    %v710 = vpop.f32.mrf.mxu0
    %711 = vmatprep.mubr.bf16.mxu0 %v365
    %712 = vmatmul.mubr.bf16.gmra.mxu0 %v364
    %v713 = vpop.f32.mrf.mxu0
    %v714 = vadd.f32 %v665, %v713
    %v715 = vpop.f32.mrf.mxu0
    %v716 = vpop.f32.mrf.mxu0
    %v717 = vadd.f32 %v668, %v716
    %v718 = vpop.f32.mrf.mxu0
    %719 = vdwg.mxu0
    %720 = vst [vmem:[#allocation2] sm:$0xff] %v706
    %721 = vst [vmem:[#allocation2 + $0x8] sm:$0xff] %v709
    %722 = vst [vmem:[#allocation2 + $0x10] sm:$0xff] %v714
    %723 = vst [vmem:[#allocation2 + $0x18] sm:$0xff] %v717
    %v724 = vld [vmem:[%s5] sm:$0xf]
    %v725 = vld [vmem:[%s5 + $0x4] sm:$0xf]
    %v726 = vld [vmem:[%s5 + $0x8] sm:$0xf]
    %v727 = vld [vmem:[%s5 + $0xc] sm:$0xf]
    %v728 = vld [vmem:[#allocation6] sm:$0xf]
    %v729 = vld [vmem:[#allocation6 + $0x4] sm:$0xf]
    %v730 = vld [vmem:[%s9] sm:$0xff]
    %v731 = vld [vmem:[%s9 + $0x8] sm:$0xff]
    %v732 = vld [vmem:[%s9 + $0x10] sm:$0xff]
    %v733 = vld [vmem:[%s9 + $0x18] sm:$0xff]
    %735 = vset.pattern.permute.xlu0 0
    %736 = vperm.xlu0 %735, %v730
    %v737 = vpop.permute.xlu0 %736
    %740 = vset.pattern.permute.xlu0 0
    %741 = vperm.xlu0 %740, %v731
    %v742 = vpop.permute.xlu0 %741
    %745 = vset.pattern.permute.xlu0 0
    %746 = vperm.xlu0 %745, %v732
    %v747 = vpop.permute.xlu0 %746
    %750 = vset.pattern.permute.xlu0 0
    %751 = vperm.xlu0 %750, %v733
    %v752 = vpop.permute.xlu0 %751
    %v758 = vunpack.c.l.b16 %v724
    %v759 = vunpack.c.l.b16 %v725
    %v760 = vunpack.c.l.b16 %v726
    %v761 = vunpack.c.l.b16 %v727
    %v762 = vpack.c.b16 %v759, %v758
    %v763 = vpack.c.b16 %v761, %v760
    %v766 = vunpack.c.l.b16 %v728
    %v767 = vunpack.c.l.b16 %v729
    %v768 = vpack.c.b16 %v767, %v766
    %vm770 = vcmask 130048
    %v772 = vsel %vm770, %v762, 0
    %v775 = vsel %vm770, %v763, 0
    %777 = vmatprep.subr.bf16.mxu0 0
    %778 = vmatpush1.bf16.msra.mxu0 0
    %779 = vmatprep.subr.bf16.mxu0 0
    %780 = vmatpush1.bf16.msra.mxu0 0
    %781 = vmatprep.subr.bf16.mxu0 0
    %782 = vmatpush1.bf16.msra.mxu0 0
    %783 = vmatprep.subr.bf16.mxu0 0
    %784 = vmatpush1.bf16.msra.mxu0 0
    %785 = vmatprep.subr.bf16.mxu0 0
    %786 = vmatpush1.bf16.msra.mxu0 0
    %787 = vmatprep.subr.bf16.mxu0 0
    %788 = vmatpush1.bf16.msra.mxu0 0
    %789 = vmatprep.subr.bf16.mxu0 0
    %790 = vmatpush1.bf16.msra.mxu0 0
    %791 = vmatprep.subr.bf16.mxu0 0
    %792 = vmatpush1.bf16.msra.mxu0 %v768
    %793 = vmatprep.subr.bf16.mxu0 0
    %794 = vmatpush2.bf16.msra.mxu0 0
    %795 = vmatprep.subr.bf16.mxu0 0
    %796 = vmatpush2.bf16.msra.mxu0 0
    %797 = vmatprep.subr.bf16.mxu0 0
    %798 = vmatpush2.bf16.msra.mxu0 0
    %799 = vmatprep.subr.bf16.mxu0 0
    %800 = vmatpush2.bf16.msra.mxu0 0
    %801 = vmatprep.subr.bf16.mxu0 0
    %802 = vmatpush2.bf16.msra.mxu0 0
    %803 = vmatprep.subr.bf16.mxu0 0
    %804 = vmatpush2.bf16.msra.mxu0 0
    %805 = vmatprep.subr.bf16.mxu0 0
    %806 = vmatpush2.bf16.msra.mxu0 0
    %807 = vmatprep.subr.bf16.mxu0 0
    %808 = vmatpush2.bf16.msra.mxu0 0
    %809 = vmatprep.mubr.bf16.mxu0 0
    %810 = vmatmul.mubr.bf16.gmra.mxu0 %v772
    %v811 = vpop.f32.mrf.mxu0
    %v812 = vadd.f32 %v737, %v811
    %v813 = vpop.f32.mrf.mxu0
    %v814 = vpop.f32.mrf.mxu0
    %v815 = vadd.f32 %v742, %v814
    %v816 = vpop.f32.mrf.mxu0
    %817 = vmatprep.mubr.bf16.mxu0 0
    %818 = vmatmul.mubr.bf16.gmra.mxu0 %v775
    %v819 = vpop.f32.mrf.mxu0
    %v820 = vadd.f32 %v747, %v819
    %v821 = vpop.f32.mrf.mxu0
    %v822 = vpop.f32.mrf.mxu0
    %v823 = vadd.f32 %v752, %v822
    %v824 = vpop.f32.mrf.mxu0
    %825 = vdwg.mxu0
    %v826 = vmax.f32 %v812, 0.0
    %v827 = vmax.f32 %v815, 0.0
    %v828 = vmax.f32 %v820, 0.0
    %v829 = vmax.f32 %v823, 0.0
    %v830 = vpack.c.bf16 %v827, %v826
    %v831 = vpack.c.bf16 %v829, %v828
    %v832 = vld [vmem:[#allocation12] sm:$0xf]
    %v833 = vld [vmem:[#allocation12 + $0x4] sm:$0xf]
    %v834 = vld [vmem:[#allocation12 + $0x8] sm:$0xf]
    %v835 = vld [vmem:[#allocation12 + $0xc] sm:$0xf]
    %v836 = vld [vmem:[#allocation12 + $0x10] sm:$0xf]
    %v837 = vld [vmem:[#allocation12 + $0x14] sm:$0xf]
    %v838 = vld [vmem:[#allocation12 + $0x18] sm:$0xf]
    %v839 = vld [vmem:[#allocation12 + $0x1c] sm:$0xf]
    %v840 = vld [vmem:[#allocation12 + $0x20] sm:$0xf]
    %v841 = vld [vmem:[#allocation12 + $0x24] sm:$0xf]
    %v842 = vld [vmem:[#allocation12 + $0x28] sm:$0xf]
    %v843 = vld [vmem:[#allocation12 + $0x2c] sm:$0xf]
    %v844 = vld [vmem:[#allocation12 + $0x30] sm:$0xf]
    %v845 = vld [vmem:[#allocation12 + $0x34] sm:$0xf]
    %v846 = vld [vmem:[#allocation12 + $0x38] sm:$0xf]
    %v847 = vld [vmem:[#allocation12 + $0x3c] sm:$0xf]
    %v864 = vunpack.c.l.b16 %v832
    %v865 = vunpack.c.l.b16 %v833
    %v866 = vunpack.c.l.b16 %v834
    %v867 = vunpack.c.l.b16 %v835
    %v868 = vunpack.c.l.b16 %v836
    %v869 = vunpack.c.l.b16 %v837
    %v870 = vunpack.c.l.b16 %v838
    %v871 = vunpack.c.l.b16 %v839
    %v872 = vunpack.c.l.b16 %v840
    %v873 = vunpack.c.l.b16 %v841
    %v874 = vunpack.c.l.b16 %v842
    %v875 = vunpack.c.l.b16 %v843
    %v876 = vunpack.c.l.b16 %v844
    %v877 = vunpack.c.l.b16 %v845
    %v878 = vunpack.c.l.b16 %v846
    %v879 = vunpack.c.l.b16 %v847
    %v880 = vpack.c.b16 %v865, %v864
    %v881 = vpack.c.b16 %v867, %v866
    %v882 = vpack.c.b16 %v869, %v868
    %v883 = vpack.c.b16 %v871, %v870
    %v884 = vpack.c.b16 %v873, %v872
    %v885 = vpack.c.b16 %v875, %v874
    %v886 = vpack.c.b16 %v877, %v876
    %v887 = vpack.c.b16 %v879, %v878
    %896 = vmatprep.subr.bf16.mxu0 0
    %897 = vmatpush1.bf16.msra.mxu0 %v887
    %898 = vmatprep.subr.bf16.mxu0 0
    %899 = vmatpush1.bf16.msra.mxu0 %v886
    %900 = vmatprep.subr.bf16.mxu0 0
    %901 = vmatpush1.bf16.msra.mxu0 %v885
    %902 = vmatprep.subr.bf16.mxu0 0
    %903 = vmatpush1.bf16.msra.mxu0 %v884
    %904 = vmatprep.subr.bf16.mxu0 0
    %905 = vmatpush1.bf16.msra.mxu0 %v883
    %906 = vmatprep.subr.bf16.mxu0 0
    %907 = vmatpush1.bf16.msra.mxu0 %v882
    %908 = vmatprep.subr.bf16.mxu0 0
    %909 = vmatpush1.bf16.msra.mxu0 %v881
    %910 = vmatprep.subr.bf16.mxu0 0
    %911 = vmatpush1.bf16.msra.mxu0 %v880
    %912 = vmatprep.subr.bf16.mxu0 0
    %913 = vmatpush2.bf16.msra.mxu0 0
    %914 = vmatprep.subr.bf16.mxu0 0
    %915 = vmatpush2.bf16.msra.mxu0 0
    %916 = vmatprep.subr.bf16.mxu0 0
    %917 = vmatpush2.bf16.msra.mxu0 0
    %918 = vmatprep.subr.bf16.mxu0 0
    %919 = vmatpush2.bf16.msra.mxu0 0
    %920 = vmatprep.subr.bf16.mxu0 0
    %921 = vmatpush2.bf16.msra.mxu0 0
    %922 = vmatprep.subr.bf16.mxu0 0
    %923 = vmatpush2.bf16.msra.mxu0 0
    %924 = vmatprep.subr.bf16.mxu0 0
    %925 = vmatpush2.bf16.msra.mxu0 0
    %926 = vmatprep.subr.bf16.mxu0 0
    %927 = vmatpush2.bf16.msra.mxu0 0
    %928 = vmatprep.mubr.bf16.mxu0 0
    %929 = vmatmul.mubr.bf16.gmra.mxu0 %v830
    %v930 = vpop.f32.mrf.mxu0
    %v931 = vadd.f32 0.0, %v930
    %v932 = vpop.f32.mrf.mxu0
    %v933 = vpop.f32.mrf.mxu0
    %v934 = vadd.f32 0.0, %v933
    %v935 = vpop.f32.mrf.mxu0
    %936 = vmatprep.mubr.bf16.mxu0 0
    %937 = vmatmul.mubr.bf16.gmra.mxu0 %v831
    %v938 = vpop.f32.mrf.mxu0
    %v939 = vadd.f32 0.0, %v938
    %v940 = vpop.f32.mrf.mxu0
    %v941 = vpop.f32.mrf.mxu0
    %v942 = vadd.f32 0.0, %v941
    %v943 = vpop.f32.mrf.mxu0
    %944 = vdwg.mxu0
    %945 = vst [vmem:[#allocation2 + $0x20] sm:$0xff] %v931
    %946 = vst [vmem:[#allocation2 + $0x28] sm:$0xff] %v934
    %947 = vst [vmem:[#allocation2 + $0x30] sm:$0xff] %v939
    %948 = vst [vmem:[#allocation2 + $0x38] sm:$0xff] %v942
    %v949 = vld [vmem:[#allocation9] sm:$0xf]
    %v950 = vld [vmem:[#allocation9 + $0x4] sm:$0xf]
    %v951 = vld [vmem:[#allocation9 + $0x8] sm:$0xf]
    %v952 = vld [vmem:[#allocation9 + $0xc] sm:$0xf]
    %v953 = vld [vmem:[#allocation8] sm:$0xf]
    %v954 = vld [vmem:[#allocation8 + $0x4] sm:$0xf]
    %v955 = vld [vmem:[#allocation8 + $0x8] sm:$0xf]
    %v956 = vld [vmem:[#allocation8 + $0xc] sm:$0xf]
    %v957 = vld [vmem:[%s10] sm:$0xff]
    %v958 = vld [vmem:[%s10 + $0x8] sm:$0xff]
    %v959 = vld [vmem:[%s10 + $0x10] sm:$0xff]
    %v960 = vld [vmem:[%s10 + $0x18] sm:$0xff]
    %962 = vset.pattern.permute.xlu0 0
    %963 = vperm.xlu0 %962, %v957
    %v964 = vpop.permute.xlu0 %963
    %967 = vset.pattern.permute.xlu0 0
    %968 = vperm.xlu0 %967, %v958
    %v969 = vpop.permute.xlu0 %968
    %972 = vset.pattern.permute.xlu0 0
    %973 = vperm.xlu0 %972, %v959
    %v974 = vpop.permute.xlu0 %973
    %977 = vset.pattern.permute.xlu0 0
    %978 = vperm.xlu0 %977, %v960
    %v979 = vpop.permute.xlu0 %978
    %v985 = vunpack.c.l.b16 %v949
    %v986 = vunpack.c.l.b16 %v950
    %v987 = vunpack.c.l.b16 %v951
    %v988 = vunpack.c.l.b16 %v952
    %v989 = vpack.c.b16 %v986, %v985
    %v990 = vpack.c.b16 %v988, %v987
    %v995 = vunpack.c.l.b16 %v953
    %v996 = vunpack.c.l.b16 %v954
    %v997 = vunpack.c.l.b16 %v955
    %v998 = vunpack.c.l.b16 %v956
    %v999 = vpack.c.b16 %v996, %v995
    %v1000 = vpack.c.b16 %v998, %v997
    %vm1003 = vcmask 261120
    %v1005 = vsel %vm1003, %v989, 0
    %v1008 = vsel %vm1003, %v990, 0
    %1010 = vmatprep.subr.bf16.mxu0 0
    %1011 = vmatpush1.bf16.msra.mxu0 0
    %1012 = vmatprep.subr.bf16.mxu0 0
    %1013 = vmatpush1.bf16.msra.mxu0 0
    %1014 = vmatprep.subr.bf16.mxu0 0
    %1015 = vmatpush1.bf16.msra.mxu0 0
    %1016 = vmatprep.subr.bf16.mxu0 0
    %1017 = vmatpush1.bf16.msra.mxu0 0
    %1018 = vmatprep.subr.bf16.mxu0 0
    %1019 = vmatpush1.bf16.msra.mxu0 0
    %1020 = vmatprep.subr.bf16.mxu0 0
    %1021 = vmatpush1.bf16.msra.mxu0 0
    %1022 = vmatprep.subr.bf16.mxu0 0
    %1023 = vmatpush1.bf16.msra.mxu0 %v1000
    %1024 = vmatprep.subr.bf16.mxu0 0
    %1025 = vmatpush1.bf16.msra.mxu0 %v999
    %1026 = vmatprep.subr.bf16.mxu0 0
    %1027 = vmatpush2.bf16.msra.mxu0 0
    %1028 = vmatprep.subr.bf16.mxu0 0
    %1029 = vmatpush2.bf16.msra.mxu0 0
    %1030 = vmatprep.subr.bf16.mxu0 0
    %1031 = vmatpush2.bf16.msra.mxu0 0
    %1032 = vmatprep.subr.bf16.mxu0 0
    %1033 = vmatpush2.bf16.msra.mxu0 0
    %1034 = vmatprep.subr.bf16.mxu0 0
    %1035 = vmatpush2.bf16.msra.mxu0 0
    %1036 = vmatprep.subr.bf16.mxu0 0
    %1037 = vmatpush2.bf16.msra.mxu0 0
    %1038 = vmatprep.subr.bf16.mxu0 0
    %1039 = vmatpush2.bf16.msra.mxu0 0
    %1040 = vmatprep.subr.bf16.mxu0 0
    %1041 = vmatpush2.bf16.msra.mxu0 0
    %1042 = vmatprep.mubr.bf16.mxu0 0
    %1043 = vmatmul.mubr.bf16.gmra.mxu0 %v1005
    %v1044 = vpop.f32.mrf.mxu0
    %v1045 = vadd.f32 %v964, %v1044
    %v1046 = vpop.f32.mrf.mxu0
    %v1047 = vpop.f32.mrf.mxu0
    %v1048 = vadd.f32 %v969, %v1047
    %v1049 = vpop.f32.mrf.mxu0
    %1050 = vmatprep.mubr.bf16.mxu0 0
    %1051 = vmatmul.mubr.bf16.gmra.mxu0 %v1008
    %v1052 = vpop.f32.mrf.mxu0
    %v1053 = vadd.f32 %v974, %v1052
    %v1054 = vpop.f32.mrf.mxu0
    %v1055 = vpop.f32.mrf.mxu0
    %v1056 = vadd.f32 %v979, %v1055
    %v1057 = vpop.f32.mrf.mxu0
    %1058 = vdwg.mxu0
    %v1059 = vmax.f32 %v1045, 0.0
    %v1060 = vmax.f32 %v1048, 0.0
    %v1061 = vmax.f32 %v1053, 0.0
    %v1062 = vmax.f32 %v1056, 0.0
    %v1063 = vpack.c.bf16 %v1060, %v1059
    %v1064 = vpack.c.bf16 %v1062, %v1061
    %v1065 = vld [vmem:[#allocation14] sm:$0xf]
    %v1066 = vld [vmem:[#allocation14 + $0x4] sm:$0xf]
    %v1067 = vld [vmem:[#allocation14 + $0x8] sm:$0xf]
    %v1068 = vld [vmem:[#allocation14 + $0xc] sm:$0xf]
    %v1073 = vunpack.c.l.b16 %v1065
    %v1074 = vunpack.c.l.b16 %v1066
    %v1075 = vunpack.c.l.b16 %v1067
    %v1076 = vunpack.c.l.b16 %v1068
    %v1077 = vpack.c.b16 %v1074, %v1073
    %v1078 = vpack.c.b16 %v1076, %v1075
    %v1082 = vsel %vm1003, %v1063, 0
    %v1085 = vsel %vm1003, %v1064, 0
    %1087 = vmatprep.subr.bf16.mxu0 0
    %1088 = vmatpush1.bf16.msra.mxu0 0
    %1089 = vmatprep.subr.bf16.mxu0 0
    %1090 = vmatpush1.bf16.msra.mxu0 0
    %1091 = vmatprep.subr.bf16.mxu0 0
    %1092 = vmatpush1.bf16.msra.mxu0 0
    %1093 = vmatprep.subr.bf16.mxu0 0
    %1094 = vmatpush1.bf16.msra.mxu0 0
    %1095 = vmatprep.subr.bf16.mxu0 0
    %1096 = vmatpush1.bf16.msra.mxu0 0
    %1097 = vmatprep.subr.bf16.mxu0 0
    %1098 = vmatpush1.bf16.msra.mxu0 0
    %1099 = vmatprep.subr.bf16.mxu0 0
    %1100 = vmatpush1.bf16.msra.mxu0 %v1078
    %1101 = vmatprep.subr.bf16.mxu0 0
    %1102 = vmatpush1.bf16.msra.mxu0 %v1077
    %1103 = vmatprep.subr.bf16.mxu0 0
    %1104 = vmatpush2.bf16.msra.mxu0 0
    %1105 = vmatprep.subr.bf16.mxu0 0
    %1106 = vmatpush2.bf16.msra.mxu0 0
    %1107 = vmatprep.subr.bf16.mxu0 0
    %1108 = vmatpush2.bf16.msra.mxu0 0
    %1109 = vmatprep.subr.bf16.mxu0 0
    %1110 = vmatpush2.bf16.msra.mxu0 0
    %1111 = vmatprep.subr.bf16.mxu0 0
    %1112 = vmatpush2.bf16.msra.mxu0 0
    %1113 = vmatprep.subr.bf16.mxu0 0
    %1114 = vmatpush2.bf16.msra.mxu0 0
    %1115 = vmatprep.subr.bf16.mxu0 0
    %1116 = vmatpush2.bf16.msra.mxu0 0
    %1117 = vmatprep.subr.bf16.mxu0 0
    %1118 = vmatpush2.bf16.msra.mxu0 0
    %1119 = vmatprep.mubr.bf16.mxu0 0
    %1120 = vmatmul.mubr.bf16.gmra.mxu0 %v1082
    %v1121 = vpop.f32.mrf.mxu0
    %v1122 = vadd.f32 0.0, %v1121
    %v1123 = vpop.f32.mrf.mxu0
    %v1124 = vpop.f32.mrf.mxu0
    %v1125 = vadd.f32 0.0, %v1124
    %v1126 = vpop.f32.mrf.mxu0
    %1127 = vmatprep.mubr.bf16.mxu0 0
    %1128 = vmatmul.mubr.bf16.gmra.mxu0 %v1085
    %v1129 = vpop.f32.mrf.mxu0
    %v1130 = vadd.f32 0.0, %v1129
    %v1131 = vpop.f32.mrf.mxu0
    %v1132 = vpop.f32.mrf.mxu0
    %v1133 = vadd.f32 0.0, %v1132
    %v1134 = vpop.f32.mrf.mxu0
    %1135 = vdwg.mxu0
    %1136 = vst [vmem:[#allocation2 + $0x40] sm:$0xff] %v1122
    %1137 = vst [vmem:[#allocation2 + $0x48] sm:$0xff] %v1125
    %1138 = vst [vmem:[#allocation2 + $0x50] sm:$0xff] %v1130
    %1139 = vst [vmem:[#allocation2 + $0x58] sm:$0xff] %v1133
    %v1140 = vld [vmem:[#allocation11] sm:$0xf]
    %v1141 = vld [vmem:[#allocation11 + $0x4] sm:$0xf]
    %v1142 = vld [vmem:[#allocation11 + $0x8] sm:$0xf]
    %v1143 = vld [vmem:[#allocation11 + $0xc] sm:$0xf]
    %v1144 = vld [vmem:[%s3] sm:$0xf]
    %v1145 = vld [vmem:[%s3 + $0x4] sm:$0xf]
    %v1146 = vld [vmem:[%s3 + $0x8] sm:$0xf]
    %v1147 = vld [vmem:[%s3 + $0xc] sm:$0xf]
    %v1148 = vld [vmem:[%s3 + $0x10] sm:$0xf]
    %v1149 = vld [vmem:[%s3 + $0x14] sm:$0xf]
    %v1150 = vld [vmem:[%s3 + $0x18] sm:$0xf]
    %v1151 = vld [vmem:[%s3 + $0x1c] sm:$0xf]
    %v1152 = vld [vmem:[%s11] sm:$0xff]
    %v1153 = vld [vmem:[%s11 + $0x8] sm:$0xff]
    %v1154 = vld [vmem:[%s11 + $0x10] sm:$0xff]
    %v1155 = vld [vmem:[%s11 + $0x18] sm:$0xff]
    %1157 = vset.pattern.permute.xlu0 0
    %1158 = vperm.xlu0 %1157, %v1152
    %v1159 = vpop.permute.xlu0 %1158
    %1162 = vset.pattern.permute.xlu0 0
    %1163 = vperm.xlu0 %1162, %v1153
    %v1164 = vpop.permute.xlu0 %1163
    %1167 = vset.pattern.permute.xlu0 0
    %1168 = vperm.xlu0 %1167, %v1154
    %v1169 = vpop.permute.xlu0 %1168
    %1172 = vset.pattern.permute.xlu0 0
    %1173 = vperm.xlu0 %1172, %v1155
    %v1174 = vpop.permute.xlu0 %1173
    %v1180 = vunpack.c.l.b16 %v1140
    %v1181 = vunpack.c.l.b16 %v1141
    %v1182 = vunpack.c.l.b16 %v1142
    %v1183 = vunpack.c.l.b16 %v1143
    %v1184 = vpack.c.b16 %v1181, %v1180
    %v1185 = vpack.c.b16 %v1183, %v1182
    %v1194 = vunpack.c.l.b16 %v1144
    %v1195 = vunpack.c.l.b16 %v1145
    %v1196 = vunpack.c.l.b16 %v1146
    %v1197 = vunpack.c.l.b16 %v1147
    %v1198 = vunpack.c.l.b16 %v1148
    %v1199 = vunpack.c.l.b16 %v1149
    %v1200 = vunpack.c.l.b16 %v1150
    %v1201 = vunpack.c.l.b16 %v1151
    %v1202 = vpack.c.b16 %v1195, %v1194
    %v1203 = vpack.c.b16 %v1197, %v1196
    %v1204 = vpack.c.b16 %v1199, %v1198
    %v1205 = vpack.c.b16 %v1201, %v1200
    %vm1210 = vcmask 523264
    %v1212 = vsel %vm1210, %v1184, 0
    %v1215 = vsel %vm1210, %v1185, 0
    %1217 = vmatprep.subr.bf16.mxu0 0
    %1218 = vmatpush1.bf16.msra.mxu0 0
    %1219 = vmatprep.subr.bf16.mxu0 0
    %1220 = vmatpush1.bf16.msra.mxu0 0
    %1221 = vmatprep.subr.bf16.mxu0 0
    %1222 = vmatpush1.bf16.msra.mxu0 0
    %1223 = vmatprep.subr.bf16.mxu0 0
    %1224 = vmatpush1.bf16.msra.mxu0 0
    %1225 = vmatprep.subr.bf16.mxu0 0
    %1226 = vmatpush1.bf16.msra.mxu0 %v1205
    %1227 = vmatprep.subr.bf16.mxu0 0
    %1228 = vmatpush1.bf16.msra.mxu0 %v1204
    %1229 = vmatprep.subr.bf16.mxu0 0
    %1230 = vmatpush1.bf16.msra.mxu0 %v1203
    %1231 = vmatprep.subr.bf16.mxu0 0
    %1232 = vmatpush1.bf16.msra.mxu0 %v1202
    %1233 = vmatprep.subr.bf16.mxu0 0
    %1234 = vmatpush2.bf16.msra.mxu0 0
    %1235 = vmatprep.subr.bf16.mxu0 0
    %1236 = vmatpush2.bf16.msra.mxu0 0
    %1237 = vmatprep.subr.bf16.mxu0 0
    %1238 = vmatpush2.bf16.msra.mxu0 0
    %1239 = vmatprep.subr.bf16.mxu0 0
    %1240 = vmatpush2.bf16.msra.mxu0 0
    %1241 = vmatprep.subr.bf16.mxu0 0
    %1242 = vmatpush2.bf16.msra.mxu0 0
    %1243 = vmatprep.subr.bf16.mxu0 0
    %1244 = vmatpush2.bf16.msra.mxu0 0
    %1245 = vmatprep.subr.bf16.mxu0 0
    %1246 = vmatpush2.bf16.msra.mxu0 0
    %1247 = vmatprep.subr.bf16.mxu0 0
    %1248 = vmatpush2.bf16.msra.mxu0 0
    %1249 = vmatprep.mubr.bf16.mxu0 0
    %1250 = vmatmul.mubr.bf16.gmra.mxu0 %v1212
    %v1251 = vpop.f32.mrf.mxu0
    %v1252 = vadd.f32 %v1159, %v1251
    %v1253 = vpop.f32.mrf.mxu0
    %v1254 = vpop.f32.mrf.mxu0
    %v1255 = vadd.f32 %v1164, %v1254
    %v1256 = vpop.f32.mrf.mxu0
    %1257 = vmatprep.mubr.bf16.mxu0 0
    %1258 = vmatmul.mubr.bf16.gmra.mxu0 %v1215
    %v1259 = vpop.f32.mrf.mxu0
    %v1260 = vadd.f32 %v1169, %v1259
    %v1261 = vpop.f32.mrf.mxu0
    %v1262 = vpop.f32.mrf.mxu0
    %v1263 = vadd.f32 %v1174, %v1262
    %v1264 = vpop.f32.mrf.mxu0
    %1265 = vdwg.mxu0
    %v1266 = vmax.f32 %v1252, 0.0
    %v1267 = vmax.f32 %v1255, 0.0
    %v1268 = vmax.f32 %v1260, 0.0
    %v1269 = vmax.f32 %v1263, 0.0
    %v1270 = vpack.c.bf16 %v1267, %v1266
    %v1271 = vpack.c.bf16 %v1269, %v1268
    %v1272 = vld [vmem:[#allocation15] sm:$0xf]
    %v1274 = vsel %vm216, %v1270, 0
    %v1277 = vsel %vm216, %v1271, 0
    %v1280 = vsel %vm223, %v1272, 0
    %1282 = vmatprep.subr.bf16.mxu0 0
    %1283 = vmatpush1.bf16.msra.mxu0 0
    %1284 = vmatprep.subr.bf16.mxu0 0
    %1285 = vmatpush1.bf16.msra.mxu0 0
    %1286 = vmatprep.subr.bf16.mxu0 0
    %1287 = vmatpush1.bf16.msra.mxu0 0
    %1288 = vmatprep.subr.bf16.mxu0 0
    %1289 = vmatpush1.bf16.msra.mxu0 0
    %1290 = vmatprep.subr.bf16.mxu0 0
    %1291 = vmatpush1.bf16.msra.mxu0 0
    %1292 = vmatprep.subr.bf16.mxu0 0
    %1293 = vmatpush1.bf16.msra.mxu0 0
    %1294 = vmatprep.subr.bf16.mxu0 0
    %1295 = vmatpush1.bf16.msra.mxu0 0
    %1296 = vmatprep.subr.bf16.mxu0 0
    %1297 = vmatpush1.bf16.msra.mxu0 %v1280
    %1298 = vmatprep.subr.bf16.mxu0 0
    %1299 = vmatpush2.bf16.msra.mxu0 0
    %1300 = vmatprep.subr.bf16.mxu0 0
    %1301 = vmatpush2.bf16.msra.mxu0 0
    %1302 = vmatprep.subr.bf16.mxu0 0
    %1303 = vmatpush2.bf16.msra.mxu0 0
    %1304 = vmatprep.subr.bf16.mxu0 0
    %1305 = vmatpush2.bf16.msra.mxu0 0
    %1306 = vmatprep.subr.bf16.mxu0 0
    %1307 = vmatpush2.bf16.msra.mxu0 0
    %1308 = vmatprep.subr.bf16.mxu0 0
    %1309 = vmatpush2.bf16.msra.mxu0 0
    %1310 = vmatprep.subr.bf16.mxu0 0
    %1311 = vmatpush2.bf16.msra.mxu0 0
    %1312 = vmatprep.subr.bf16.mxu0 0
    %1313 = vmatpush2.bf16.msra.mxu0 0
    %1314 = vmatprep.mubr.bf16.mxu0 0
    %1315 = vmatmul.mubr.bf16.gmra.mxu0 %v1274
    %v1316 = vpop.f32.mrf.mxu0
    %v1317 = vadd.f32 0.0, %v1316
    %v1318 = vpop.f32.mrf.mxu0
    %v1319 = vpop.f32.mrf.mxu0
    %v1320 = vadd.f32 0.0, %v1319
    %v1321 = vpop.f32.mrf.mxu0
    %1322 = vmatprep.mubr.bf16.mxu0 0
    %1323 = vmatmul.mubr.bf16.gmra.mxu0 %v1277
    %v1324 = vpop.f32.mrf.mxu0
    %v1325 = vadd.f32 0.0, %v1324
    %v1326 = vpop.f32.mrf.mxu0
    %v1327 = vpop.f32.mrf.mxu0
    %v1328 = vadd.f32 0.0, %v1327
    %v1329 = vpop.f32.mrf.mxu0
    %1330 = vdwg.mxu0
    %1331 = vst [vmem:[#allocation2 + $0x60] sm:$0xff] %v1317
    %1332 = vst [vmem:[#allocation2 + $0x68] sm:$0xff] %v1320
    %1333 = vst [vmem:[#allocation2 + $0x70] sm:$0xff] %v1325
    %1334 = vst [vmem:[#allocation2 + $0x78] sm:$0xff] %v1328
    %v1335 = vld [vmem:[%s16] sm:$0xf]
    %v1336 = vld [vmem:[%s16 + $0x4] sm:$0xf]
    %v1337 = vld [vmem:[%s16 + $0x8] sm:$0xf]
    %v1338 = vld [vmem:[%s16 + $0xc] sm:$0xf]
    %v1339 = vld [vmem:[#allocation2] sm:$0xff]
    %v1340 = vld [vmem:[#allocation2 + $0x8] sm:$0xff]
    %v1341 = vld [vmem:[#allocation2 + $0x10] sm:$0xff]
    %v1342 = vld [vmem:[#allocation2 + $0x18] sm:$0xff]
    %v1343 = vld [vmem:[#allocation2 + $0x20] sm:$0xff]
    %v1344 = vld [vmem:[#allocation2 + $0x28] sm:$0xff]
    %v1345 = vld [vmem:[#allocation2 + $0x30] sm:$0xff]
    %v1346 = vld [vmem:[#allocation2 + $0x38] sm:$0xff]
    %v1347 = vld [vmem:[#allocation2 + $0x40] sm:$0xff]
    %v1348 = vld [vmem:[#allocation2 + $0x48] sm:$0xff]
    %v1349 = vld [vmem:[#allocation2 + $0x50] sm:$0xff]
    %v1350 = vld [vmem:[#allocation2 + $0x58] sm:$0xff]
    %v1351 = vld [vmem:[#allocation2 + $0x60] sm:$0xff]
    %v1352 = vld [vmem:[#allocation2 + $0x68] sm:$0xff]
    %v1353 = vld [vmem:[#allocation2 + $0x70] sm:$0xff]
    %v1354 = vld [vmem:[#allocation2 + $0x78] sm:$0xff]
    %v1355 = vpack.c.bf16 %v1340, %v1339
    %v1356 = vpack.c.bf16 %v1342, %v1341
    %v1357 = vpack.c.bf16 %v1344, %v1343
    %v1358 = vpack.c.bf16 %v1346, %v1345
    %v1359 = vpack.c.bf16 %v1348, %v1347
    %v1360 = vpack.c.bf16 %v1350, %v1349
    %v1361 = vpack.c.bf16 %v1352, %v1351
    %v1362 = vpack.c.bf16 %v1354, %v1353
    %v1363 = vld [vmem:[%s17] sm:$0xff]
    %v1364 = vld [vmem:[%s17 + $0x8] sm:$0xff]
    %v1365 = vld [vmem:[%s17 + $0x10] sm:$0xff]
    %v1366 = vld [vmem:[%s17 + $0x18] sm:$0xff]
    %1368 = vset.pattern.permute.xlu0 0
    %1369 = vperm.xlu0 %1368, %v1363
    %v1370 = vpop.permute.xlu0 %1369
    %1373 = vset.pattern.permute.xlu0 0
    %1374 = vperm.xlu0 %1373, %v1364
    %v1375 = vpop.permute.xlu0 %1374
    %1378 = vset.pattern.permute.xlu0 0
    %1379 = vperm.xlu0 %1378, %v1365
    %v1380 = vpop.permute.xlu0 %1379
    %1383 = vset.pattern.permute.xlu0 0
    %1384 = vperm.xlu0 %1383, %v1366
    %v1385 = vpop.permute.xlu0 %1384
    %v1391 = vunpack.c.l.b16 %v1335
    %v1392 = vunpack.c.l.b16 %v1336
    %v1393 = vunpack.c.l.b16 %v1337
    %v1394 = vunpack.c.l.b16 %v1338
    %v1395 = vpack.c.b16 %v1392, %v1391
    %v1396 = vpack.c.b16 %v1394, %v1393
    %1399 = vmatprep.subr.bf16.mxu0 0
    %1400 = vmatpush1.bf16.msra.mxu0 %v1362
    %1401 = vmatprep.subr.bf16.mxu0 0
    %1402 = vmatpush1.bf16.msra.mxu0 %v1361
    %1403 = vmatprep.subr.bf16.mxu0 0
    %1404 = vmatpush1.bf16.msra.mxu0 %v1360
    %1405 = vmatprep.subr.bf16.mxu0 0
    %1406 = vmatpush1.bf16.msra.mxu0 %v1359
    %1407 = vmatprep.subr.bf16.mxu0 0
    %1408 = vmatpush1.bf16.msra.mxu0 %v1358
    %1409 = vmatprep.subr.bf16.mxu0 0
    %1410 = vmatpush1.bf16.msra.mxu0 %v1357
    %1411 = vmatprep.subr.bf16.mxu0 0
    %1412 = vmatpush1.bf16.msra.mxu0 %v1356
    %1413 = vmatprep.subr.bf16.mxu0 0
    %1414 = vmatpush1.bf16.msra.mxu0 %v1355
    %1415 = vmatprep.subr.bf16.mxu0 0
    %1416 = vmatpush2.bf16.msra.mxu0 0
    %1417 = vmatprep.subr.bf16.mxu0 0
    %1418 = vmatpush2.bf16.msra.mxu0 0
    %1419 = vmatprep.subr.bf16.mxu0 0
    %1420 = vmatpush2.bf16.msra.mxu0 0
    %1421 = vmatprep.subr.bf16.mxu0 0
    %1422 = vmatpush2.bf16.msra.mxu0 0
    %1423 = vmatprep.subr.bf16.mxu0 0
    %1424 = vmatpush2.bf16.msra.mxu0 0
    %1425 = vmatprep.subr.bf16.mxu0 0
    %1426 = vmatpush2.bf16.msra.mxu0 0
    %1427 = vmatprep.subr.bf16.mxu0 0
    %1428 = vmatpush2.bf16.msra.mxu0 0
    %1429 = vmatprep.subr.bf16.mxu0 0
    %1430 = vmatpush2.bf16.msra.mxu0 0
    %1431 = vmatprep.mubr.bf16.mxu0 0
    %1432 = vmatmul.mubr.bf16.gmra.mxu0 %v1395
    %v1433 = vpop.f32.mrf.mxu0
    %v1434 = vadd.f32 %v1370, %v1433
    %v1435 = vpop.f32.mrf.mxu0
    %v1436 = vpop.f32.mrf.mxu0
    %v1437 = vadd.f32 %v1375, %v1436
    %v1438 = vpop.f32.mrf.mxu0
    %1439 = vmatprep.mubr.bf16.mxu0 0
    %1440 = vmatmul.mubr.bf16.gmra.mxu0 %v1396
    %v1441 = vpop.f32.mrf.mxu0
    %v1442 = vadd.f32 %v1380, %v1441
    %v1443 = vpop.f32.mrf.mxu0
    %v1444 = vpop.f32.mrf.mxu0
    %v1445 = vadd.f32 %v1385, %v1444
    %v1446 = vpop.f32.mrf.mxu0
    %1447 = vdwg.mxu0
    %v1448 = vmax.f32 %v1434, 0.0
    %v1449 = vmax.f32 %v1437, 0.0
    %v1450 = vmax.f32 %v1442, 0.0
    %v1451 = vmax.f32 %v1445, 0.0
    %1452 = vst [vmem:[#allocation17] sm:$0xff] %v1448
    %1453 = vst [vmem:[#allocation17 + $0x8] sm:$0xff] %v1449
    %1454 = vst [vmem:[#allocation17 + $0x10] sm:$0xff] %v1450
    %1455 = vst [vmem:[#allocation17 + $0x18] sm:$0xff] %v1451
    // Predicated region
    $region106: #{tpu_custom_call.1} parent=1 // pred_check
      _
    $region107: #{tpu_custom_call.1} parent=1 // pred_check_branch
      %1457 = sbr.rel (0) target = $region109
    $region108: #{tpu_custom_call.1} parent=1 // pred_region
      %s1459 = ssub.s32 512, 512
      %1460 = vsyncadd [#allocation5], %s1459
      %s1461 = sshll.u32 [#allocation17], 4
      %s1462 = int_to_ptr.vmem [resolvable:$true] %s1461
      %1467 = dma.vmem_to_hbm [thread:$0]  %s1462, 512, %s18, [#allocation5], 128, 128, 8
    $region109: #{tpu_custom_call.1} parent=1 // pred_fallthru
      _
    // Predicated region
    $region110: #{tpu_custom_call.1} parent=1 // pred_check
      _
    $region111: #{tpu_custom_call.1} parent=1 // pred_check_branch
      %1469 = sbr.rel (0) target = $region113
    $region112: #{tpu_custom_call.1} parent=1 // pred_region
      %1470 = dma.done [#allocation5], 512
    $region113: #{tpu_custom_call.1} parent=1 // pred_fallthru
      _
    %1471 = vsyncpa [#allocation4], 1
    %1472 = vsyncpa [#allocation7], 1
    %1473 = vsyncpa [#allocation10], 1
    %1474 = vsyncpa [#allocation13], 1
    %1475 = vsyncpa [#allocation16], 1
    %1476 = vsyncpa [#allocation5], 1

</llo_original>
